<compile_context>
chip_gen: v5e
topology: v5e:2x2
jax: 0.10.0
libtpu: 0.0.40
codegen_flags: <defaults>
</compile_context>

<pallas_src>
import jax
import jax.numpy as jnp
from jax.experimental import pallas as pl
from jax.experimental.pallas import tpu as pltpu

MXU_DTYPE = jnp.bfloat16   # MXU operand dtype; jnp.float32 for exact matmuls


def _cdiv(a, b):
    return -(-a // b)


# ---------------------------------------------------------------------------
# Fused LeNet kernel (whole network per batch tile)
# ---------------------------------------------------------------------------
def _lenet_kernel(x_ref, w1_ref, b1_ref, w2_ref, b2_ref,
                  fc1w_ref, fc1b_ref, fc2w_ref, fc2b_ref, fc3w_ref, fc3b_ref,
                  out_ref):
    f32 = jnp.float32
    tb = out_ref.shape[0]                      # batch rows handled per grid step

    def conv_relu(act, w_ref, b_ref, h_out):
        """act: (h_in*tb, W_in*Cin) f32, rows ordered (h, b).
        w_ref: (KH, W_in*Cin, W_out*Cout) banded matrices (parity-ordered cols).
        Returns (h_out*tb, W_out*Cout) f32 after bias + ReLU."""
        kh = w_ref.shape[0]
        acc = None
        for i in range(kh):                    # KH taps, unrolled at trace time
            a = act[i * tb:(i + h_out) * tb, :].astype(MXU_DTYPE)
            part = jnp.dot(a, w_ref[i], preferred_element_type=f32)
            acc = part if acc is None else acc + part
        return jnp.maximum(acc + b_ref[...], 0.0)        # f32 epilogue

    def maxpool2x2(y, h_out):
        """y: (h_out*tb, W_out*Cout) f32, output columns parity-ordered."""
        half = y.shape[-1] // 2
        yw = jnp.maximum(y[:, :half], y[:, half:])       # pool along W (lanes)
        rows = [jnp.maximum(yw[(2 * k) * tb:(2 * k + 1) * tb, :],
                            yw[(2 * k + 1) * tb:(2 * k + 2) * tb, :])
                for k in range(h_out // 2)]              # pool along H (row slabs)
        return jnp.concatenate(rows, axis=0)

    x = x_ref[...]                                       # (28*tb, 28) f32
    y = conv_relu(x, w1_ref, b1_ref, 24)                 # (24*tb, 144)
    y = maxpool2x2(y, 24)                                # (12*tb, 72)
    y = conv_relu(y, w2_ref, b2_ref, 8)                  # (8*tb, 128)
    y = maxpool2x2(y, 8)                                 # (4*tb, 64)

    # Flatten to (tb, 256) in (h, w, c) order; fc1 weights are pre-permuted to
    # match, so no in-kernel transpose is needed.
    feat = jnp.concatenate([y[h * tb:(h + 1) * tb, :] for h in range(4)],
                           axis=-1)

    h1 = jnp.maximum(jnp.dot(feat.astype(MXU_DTYPE), fc1w_ref[...],
                             preferred_element_type=f32) + fc1b_ref[...], 0.0)
    h2 = jnp.maximum(jnp.dot(h1.astype(MXU_DTYPE), fc2w_ref[...],
                             preferred_element_type=f32) + fc2b_ref[...], 0.0)
    logits = jnp.dot(h2.astype(MXU_DTYPE), fc3w_ref[...],
                     preferred_element_type=f32) + fc3b_ref[...]
    out_ref[...] = logits.astype(out_ref.dtype)


# ---------------------------------------------------------------------------
# Host-side weight layout prep (all tiny; foldable to init time)
# ---------------------------------------------------------------------------
def _banded_conv_weight(w_hwio, w_in):
    """(KH, KW, Cin, Cout) conv kernel -> (KH, W_in*Cin, W_out*Cout) banded
    matrices that contract over the packed (w, cin) lane dim.  Output columns
    are ordered (ow parity, ow//2, cout) so a 2x2 max-pool along W becomes a
    single max of the two column halves."""
    kh, kw, cin, cout = w_hwio.shape
    w_out = w_in - kw + 1
    w_idx = jnp.arange(w_in)[:, None]
    ow_idx = jnp.arange(w_out)[None, :]
    j = w_idx - ow_idx                                     # (w_in, w_out)
    valid = (j >= 0) & (j < kw)
    taps = w_hwio[:, jnp.clip(j, 0, kw - 1)]               # (kh, w_in, w_out, cin, cout)
    taps = jnp.where(valid[None, :, :, None, None], taps, 0.0)
    ow_order = jnp.concatenate([jnp.arange(0, w_out, 2), jnp.arange(1, w_out, 2)])
    taps = taps[:, :, ow_order]                            # parity-ordered ow
    taps = jnp.transpose(taps, (0, 1, 3, 2, 4))            # (kh, w_in, cin, w_out, cout)
    return taps.reshape(kh, w_in * cin, w_out * cout)


# ---------------------------------------------------------------------------
# LeNet forward (single fused pallas_call)
# ---------------------------------------------------------------------------
@jax.jit
def lenet_forward(x_nchw, p):
    n = x_nchw.shape[0]
    tb = min(64, 8 * _cdiv(n, 8))          # batch rows per grid step (mult of 8)
    n_pad = _cdiv(n, tb) * tb

    # Input layout prep (tiny XLA glue): NCHW -> per-block (28*tb, 28),
    # rows ordered (h, batch-within-block).
    x = x_nchw.reshape(n, 28, 28).astype(jnp.float32)
    x = jnp.pad(x, ((0, n_pad - n), (0, 0), (0, 0)))
    x = (x.reshape(n_pad // tb, tb, 28, 28)
           .transpose(0, 2, 1, 3)
           .reshape(n_pad // tb, 28 * tb, 28))

    # Weight layout prep (all < 256 KB total).
    w1b = _banded_conv_weight(p["w1"], 28).astype(MXU_DTYPE)   # (5, 28, 144)
    w2b = _banded_conv_weight(p["w2"], 12).astype(MXU_DTYPE)   # (5, 72, 128)
    b1r = jnp.tile(p["b1"], 24).reshape(1, 144).astype(jnp.float32)
    b2r = jnp.tile(p["b2"], 8).reshape(1, 128).astype(jnp.float32)
    # fc1 rows permuted from PyTorch (c, h, w) flatten order to our (h, w, c).
    fc1w = (p["fc1_w"].reshape(16, 4, 4, 120).transpose(1, 2, 0, 3)
            .reshape(256, 120).astype(MXU_DTYPE))
    fc2w = p["fc2_w"].astype(MXU_DTYPE)
    fc3w = p["fc3_w"].astype(MXU_DTYPE)
    fc1b = p["fc1_b"].reshape(1, 120).astype(jnp.float32)
    fc2b = p["fc2_b"].reshape(1, 84).astype(jnp.float32)
    fc3b = p["fc3_b"].reshape(1, 10).astype(jnp.float32)

    def full(*shape):                       # whole-array, VMEM-resident operand
        return pl.BlockSpec(shape, lambda g: (0,) * len(shape))

    out = pl.pallas_call(
        _lenet_kernel,
        out_shape=jax.ShapeDtypeStruct((n_pad, 10), jnp.float32),
        grid=(n_pad // tb,),
        in_specs=[
            pl.BlockSpec((None, 28 * tb, 28), lambda g: (g, 0, 0)),  # input tile
            full(5, 28, 144), full(1, 144),                          # conv1
            full(5, 72, 128), full(1, 128),                          # conv2
            full(256, 120), full(1, 120),                            # fc1
            full(120, 84), full(1, 84),                              # fc2
            full(84, 10), full(1, 10),                               # fc3
        ],
        out_specs=pl.BlockSpec((tb, 10), lambda g: (g, 0)),
        compiler_params=pltpu.CompilerParams(
            dimension_semantics=("parallel",)),
    )(x, w1b, b1r, w2b, b2r, fc1w, fc1b, fc2w, fc2b, fc3w, fc3b)
    return out[:n]


# ---------------------------------------------------------------------------
# Pure-JAX reference (correctness check only)
# ---------------------------------------------------------------------------
def lenet_reference(x_nchw, p):
    x = jnp.transpose(x_nchw, (0, 2, 3, 1)).astype(jnp.float32)

    def conv_relu(x, w, b):
        y = jax.lax.conv_general_dilated(
            x, w, window_strides=(1, 1), padding="VALID",
            dimension_numbers=("NHWC", "HWIO", "NHWC"))
        return jax.nn.relu(y + b)

    def pool(x):
        n, h, w, c = x.shape
        return x.reshape(n, h // 2, 2, w // 2, 2, c).max(axis=(2, 4))

    y = pool(conv_relu(x, p["w1"], p["b1"]))
    y = pool(conv_relu(y, p["w2"], p["b2"]))
    n = y.shape[0]
    y = jnp.transpose(y, (0, 3, 1, 2)).reshape(n, 256)      # PyTorch flatten order
    y = jax.nn.relu(y @ p["fc1_w"] + p["fc1_b"])
    y = jax.nn.relu(y @ p["fc2_w"] + p["fc2_b"])
    return y @ p["fc3_w"] + p["fc3_b"]


# ---------------------------------------------------------------------------
# Deterministic parameter init (PyTorch-style U(-1/sqrt(fan_in), 1/sqrt(fan_in)))
# ---------------------------------------------------------------------------
def init_params(key):
    def u(k, shape, fan_in):
        bound = 1.0 / (fan_in ** 0.5)
        return jax.random.uniform(k, shape, jnp.float32, -bound, bound)

    ks = jax.random.split(key, 10)
    return dict(
        w1=u(ks[0], (5, 5, 1, 6), 25),       # conv1 weight, HWIO
        b1=u(ks[1], (6,), 25),
        w2=u(ks[2], (5, 5, 6, 16), 150),     # conv2 weight, HWIO
        b2=u(ks[3], (16,), 150),
        fc1_w=u(ks[4], (256, 120), 256),
        fc1_b=u(ks[5], (120,), 256),
        fc2_w=u(ks[6], (120, 84), 120),
        fc2_b=u(ks[7], (84,), 120),
        fc3_w=u(ks[8], (84, 10), 84),
        fc3_b=u(ks[9], (10,), 84),
    )


if __name__ == "__main__":
    key = jax.random.PRNGKey(0)
    pkey, xkey = jax.random.split(key)
    params = init_params(pkey)

    # PyTorch-style NCHW input; LeNet's fc1 (16*4*4) implies 28x28 spatial.
    x = jax.random.normal(xkey, (2, 1, 28, 28), jnp.float32)

    out = jax.block_until_ready(lenet_forward(x, params))
    assert out.shape == (2, 10)

    ref = lenet_reference(x, params)
    # bf16 MXU operands (f32 accumulation) => looser tolerance than pure f32.
    tol = 5e-2 if MXU_DTYPE == jnp.bfloat16 else 1e-4
    if not bool(jnp.allclose(out, ref, atol=tol, rtol=tol)):
        raise AssertionError("Pallas LeNet output does not match JAX reference")

    print("KERNEL_OK")
</pallas_src>

<mosaic_0001>
module attributes {stable_mosaic.version = 11 : i64} {
  func.func @_lenet_kernel(%arg0: i32, %arg1: memref<1x224x28xf32, #tpu.memory_space<vmem>>, %arg2: memref<5x28x144xbf16, #tpu.memory_space<vmem>>, %arg3: memref<1x144xf32, #tpu.memory_space<vmem>>, %arg4: memref<5x72x128xbf16, #tpu.memory_space<vmem>>, %arg5: memref<1x128xf32, #tpu.memory_space<vmem>>, %arg6: memref<256x120xbf16, #tpu.memory_space<vmem>>, %arg7: memref<1x120xf32, #tpu.memory_space<vmem>>, %arg8: memref<120x84xbf16, #tpu.memory_space<vmem>>, %arg9: memref<1x84xf32, #tpu.memory_space<vmem>>, %arg10: memref<84x10xbf16, #tpu.memory_space<vmem>>, %arg11: memref<1x10xf32, #tpu.memory_space<vmem>>, %arg12: memref<8x10xf32, #tpu.memory_space<vmem>>) attributes {dimension_semantics = [#tpu.dimension_semantics<parallel>], iteration_bounds = array<i64: 1>, scalar_prefetch = 0 : i64, scratch_operands = 0 : i64, tpu.core_type = #tpu.core_type<tc>, window_params = [{transform_indices = @transform_0, window_bounds = array<i64: 1, 224, 28>}, {pipeline_mode = #tpu.pipeline_mode<synchronous>, transform_indices = @transform_1, window_bounds = array<i64: 5, 28, 144>}, {pipeline_mode = #tpu.pipeline_mode<synchronous>, transform_indices = @transform_2, window_bounds = array<i64: 1, 144>}, {pipeline_mode = #tpu.pipeline_mode<synchronous>, transform_indices = @transform_3, window_bounds = array<i64: 5, 72, 128>}, {pipeline_mode = #tpu.pipeline_mode<synchronous>, transform_indices = @transform_4, window_bounds = array<i64: 1, 128>}, {pipeline_mode = #tpu.pipeline_mode<synchronous>, transform_indices = @transform_5, window_bounds = array<i64: 256, 120>}, {pipeline_mode = #tpu.pipeline_mode<synchronous>, transform_indices = @transform_6, window_bounds = array<i64: 1, 120>}, {pipeline_mode = #tpu.pipeline_mode<synchronous>, transform_indices = @transform_7, window_bounds = array<i64: 120, 84>}, {pipeline_mode = #tpu.pipeline_mode<synchronous>, transform_indices = @transform_8, window_bounds = array<i64: 1, 84>}, {pipeline_mode = #tpu.pipeline_mode<synchronous>, transform_indices = @transform_9, window_bounds = array<i64: 84, 10>}, {pipeline_mode = #tpu.pipeline_mode<synchronous>, transform_indices = @transform_10, window_bounds = array<i64: 1, 10>}, {transform_indices = @transform_11, window_bounds = array<i64: 8, 10>}]} {
    %c0 = arith.constant 0 : index
    %c0_0 = arith.constant 0 : index
    %c0_1 = arith.constant 0 : index
    %0 = vector.load %arg1[%c0, %c0_0, %c0_1] : memref<1x224x28xf32, #tpu.memory_space<vmem>>, vector<1x224x28xf32>
    %1 = vector.shape_cast %0 : vector<1x224x28xf32> to vector<224x28xf32>
    %2 = vector.extract_strided_slice %1 {offsets = [0, 0], sizes = [192, 28], strides = [1, 1]} : vector<224x28xf32> to vector<192x28xf32>
    %3 = arith.truncf %2 : vector<192x28xf32> to vector<192x28xbf16>
    %c0_2 = arith.constant 0 : index
    %c0_3 = arith.constant 0 : index
    %c0_4 = arith.constant 0 : index
    %4 = vector.load %arg2[%c0_2, %c0_3, %c0_4] : memref<5x28x144xbf16, #tpu.memory_space<vmem>>, vector<1x28x144xbf16>
    %5 = vector.shape_cast %4 : vector<1x28x144xbf16> to vector<28x144xbf16>
    %cst = arith.constant dense<0.000000e+00> : vector<192x144xf32>
    %6 = tpu.matmul %3, %5, %cst {dimension_numbers = #tpu.dot_dimension_numbers<[1], [0], [0], [1], [0, 0, 1, 1], [], []>} : vector<192x28xbf16>, vector<28x144xbf16>, vector<192x144xf32> -> vector<192x144xf32>
    %7 = vector.extract_strided_slice %1 {offsets = [8, 0], sizes = [192, 28], strides = [1, 1]} : vector<224x28xf32> to vector<192x28xf32>
    %8 = arith.truncf %7 : vector<192x28xf32> to vector<192x28xbf16>
    %c1 = arith.constant 1 : index
    %c0_5 = arith.constant 0 : index
    %c0_6 = arith.constant 0 : index
    %9 = vector.load %arg2[%c1, %c0_5, %c0_6] : memref<5x28x144xbf16, #tpu.memory_space<vmem>>, vector<1x28x144xbf16>
    %10 = vector.shape_cast %9 : vector<1x28x144xbf16> to vector<28x144xbf16>
    %cst_7 = arith.constant dense<0.000000e+00> : vector<192x144xf32>
    %11 = tpu.matmul %8, %10, %cst_7 {dimension_numbers = #tpu.dot_dimension_numbers<[1], [0], [0], [1], [0, 0, 1, 1], [], []>} : vector<192x28xbf16>, vector<28x144xbf16>, vector<192x144xf32> -> vector<192x144xf32>
    %12 = arith.addf %6, %11 : vector<192x144xf32>
    %13 = vector.extract_strided_slice %1 {offsets = [16, 0], sizes = [192, 28], strides = [1, 1]} : vector<224x28xf32> to vector<192x28xf32>
    %14 = arith.truncf %13 : vector<192x28xf32> to vector<192x28xbf16>
    %c2 = arith.constant 2 : index
    %c0_8 = arith.constant 0 : index
    %c0_9 = arith.constant 0 : index
    %15 = vector.load %arg2[%c2, %c0_8, %c0_9] : memref<5x28x144xbf16, #tpu.memory_space<vmem>>, vector<1x28x144xbf16>
    %16 = vector.shape_cast %15 : vector<1x28x144xbf16> to vector<28x144xbf16>
    %cst_10 = arith.constant dense<0.000000e+00> : vector<192x144xf32>
    %17 = tpu.matmul %14, %16, %cst_10 {dimension_numbers = #tpu.dot_dimension_numbers<[1], [0], [0], [1], [0, 0, 1, 1], [], []>} : vector<192x28xbf16>, vector<28x144xbf16>, vector<192x144xf32> -> vector<192x144xf32>
    %18 = arith.addf %12, %17 : vector<192x144xf32>
    %19 = vector.extract_strided_slice %1 {offsets = [24, 0], sizes = [192, 28], strides = [1, 1]} : vector<224x28xf32> to vector<192x28xf32>
    %20 = arith.truncf %19 : vector<192x28xf32> to vector<192x28xbf16>
    %c3 = arith.constant 3 : index
    %c0_11 = arith.constant 0 : index
    %c0_12 = arith.constant 0 : index
    %21 = vector.load %arg2[%c3, %c0_11, %c0_12] : memref<5x28x144xbf16, #tpu.memory_space<vmem>>, vector<1x28x144xbf16>
    %22 = vector.shape_cast %21 : vector<1x28x144xbf16> to vector<28x144xbf16>
    %cst_13 = arith.constant dense<0.000000e+00> : vector<192x144xf32>
    %23 = tpu.matmul %20, %22, %cst_13 {dimension_numbers = #tpu.dot_dimension_numbers<[1], [0], [0], [1], [0, 0, 1, 1], [], []>} : vector<192x28xbf16>, vector<28x144xbf16>, vector<192x144xf32> -> vector<192x144xf32>
    %24 = arith.addf %18, %23 : vector<192x144xf32>
    %25 = vector.extract_strided_slice %1 {offsets = [32, 0], sizes = [192, 28], strides = [1, 1]} : vector<224x28xf32> to vector<192x28xf32>
    %26 = arith.truncf %25 : vector<192x28xf32> to vector<192x28xbf16>
    %c4 = arith.constant 4 : index
    %c0_14 = arith.constant 0 : index
    %c0_15 = arith.constant 0 : index
    %27 = vector.load %arg2[%c4, %c0_14, %c0_15] : memref<5x28x144xbf16, #tpu.memory_space<vmem>>, vector<1x28x144xbf16>
    %28 = vector.shape_cast %27 : vector<1x28x144xbf16> to vector<28x144xbf16>
    %cst_16 = arith.constant dense<0.000000e+00> : vector<192x144xf32>
    %29 = tpu.matmul %26, %28, %cst_16 {dimension_numbers = #tpu.dot_dimension_numbers<[1], [0], [0], [1], [0, 0, 1, 1], [], []>} : vector<192x28xbf16>, vector<28x144xbf16>, vector<192x144xf32> -> vector<192x144xf32>
    %30 = arith.addf %24, %29 : vector<192x144xf32>
    %c0_17 = arith.constant 0 : index
    %c0_18 = arith.constant 0 : index
    %31 = vector.load %arg3[%c0_17, %c0_18] : memref<1x144xf32, #tpu.memory_space<vmem>>, vector<1x144xf32>
    %32 = vector.broadcast %31 : vector<1x144xf32> to vector<192x144xf32>
    %33 = arith.addf %30, %32 : vector<192x144xf32>
    %cst_19 = arith.constant 0.000000e+00 : f32
    %34 = vector.broadcast %cst_19 : f32 to vector<192x144xf32>
    %35 = arith.maximumf %33, %34 : vector<192x144xf32>
    %36 = vector.extract_strided_slice %35 {offsets = [0, 0], sizes = [192, 72], strides = [1, 1]} : vector<192x144xf32> to vector<192x72xf32>
    %37 = vector.extract_strided_slice %35 {offsets = [0, 72], sizes = [192, 72], strides = [1, 1]} : vector<192x144xf32> to vector<192x72xf32>
    %38 = arith.maximumf %36, %37 : vector<192x72xf32>
    %39 = vector.extract_strided_slice %38 {offsets = [0, 0], sizes = [8, 72], strides = [1, 1]} : vector<192x72xf32> to vector<8x72xf32>
    %40 = vector.extract_strided_slice %38 {offsets = [8, 0], sizes = [8, 72], strides = [1, 1]} : vector<192x72xf32> to vector<8x72xf32>
    %41 = arith.maximumf %39, %40 : vector<8x72xf32>
    %42 = vector.extract_strided_slice %38 {offsets = [16, 0], sizes = [8, 72], strides = [1, 1]} : vector<192x72xf32> to vector<8x72xf32>
    %43 = vector.extract_strided_slice %38 {offsets = [24, 0], sizes = [8, 72], strides = [1, 1]} : vector<192x72xf32> to vector<8x72xf32>
    %44 = arith.maximumf %42, %43 : vector<8x72xf32>
    %45 = vector.extract_strided_slice %38 {offsets = [32, 0], sizes = [8, 72], strides = [1, 1]} : vector<192x72xf32> to vector<8x72xf32>
    %46 = vector.extract_strided_slice %38 {offsets = [40, 0], sizes = [8, 72], strides = [1, 1]} : vector<192x72xf32> to vector<8x72xf32>
    %47 = arith.maximumf %45, %46 : vector<8x72xf32>
    %48 = vector.extract_strided_slice %38 {offsets = [48, 0], sizes = [8, 72], strides = [1, 1]} : vector<192x72xf32> to vector<8x72xf32>
    %49 = vector.extract_strided_slice %38 {offsets = [56, 0], sizes = [8, 72], strides = [1, 1]} : vector<192x72xf32> to vector<8x72xf32>
    %50 = arith.maximumf %48, %49 : vector<8x72xf32>
    %51 = vector.extract_strided_slice %38 {offsets = [64, 0], sizes = [8, 72], strides = [1, 1]} : vector<192x72xf32> to vector<8x72xf32>
    %52 = vector.extract_strided_slice %38 {offsets = [72, 0], sizes = [8, 72], strides = [1, 1]} : vector<192x72xf32> to vector<8x72xf32>
    %53 = arith.maximumf %51, %52 : vector<8x72xf32>
    %54 = vector.extract_strided_slice %38 {offsets = [80, 0], sizes = [8, 72], strides = [1, 1]} : vector<192x72xf32> to vector<8x72xf32>
    %55 = vector.extract_strided_slice %38 {offsets = [88, 0], sizes = [8, 72], strides = [1, 1]} : vector<192x72xf32> to vector<8x72xf32>
    %56 = arith.maximumf %54, %55 : vector<8x72xf32>
    %57 = vector.extract_strided_slice %38 {offsets = [96, 0], sizes = [8, 72], strides = [1, 1]} : vector<192x72xf32> to vector<8x72xf32>
    %58 = vector.extract_strided_slice %38 {offsets = [104, 0], sizes = [8, 72], strides = [1, 1]} : vector<192x72xf32> to vector<8x72xf32>
    %59 = arith.maximumf %57, %58 : vector<8x72xf32>
    %60 = vector.extract_strided_slice %38 {offsets = [112, 0], sizes = [8, 72], strides = [1, 1]} : vector<192x72xf32> to vector<8x72xf32>
    %61 = vector.extract_strided_slice %38 {offsets = [120, 0], sizes = [8, 72], strides = [1, 1]} : vector<192x72xf32> to vector<8x72xf32>
    %62 = arith.maximumf %60, %61 : vector<8x72xf32>
    %63 = vector.extract_strided_slice %38 {offsets = [128, 0], sizes = [8, 72], strides = [1, 1]} : vector<192x72xf32> to vector<8x72xf32>
    %64 = vector.extract_strided_slice %38 {offsets = [136, 0], sizes = [8, 72], strides = [1, 1]} : vector<192x72xf32> to vector<8x72xf32>
    %65 = arith.maximumf %63, %64 : vector<8x72xf32>
    %66 = vector.extract_strided_slice %38 {offsets = [144, 0], sizes = [8, 72], strides = [1, 1]} : vector<192x72xf32> to vector<8x72xf32>
    %67 = vector.extract_strided_slice %38 {offsets = [152, 0], sizes = [8, 72], strides = [1, 1]} : vector<192x72xf32> to vector<8x72xf32>
    %68 = arith.maximumf %66, %67 : vector<8x72xf32>
    %69 = vector.extract_strided_slice %38 {offsets = [160, 0], sizes = [8, 72], strides = [1, 1]} : vector<192x72xf32> to vector<8x72xf32>
    %70 = vector.extract_strided_slice %38 {offsets = [168, 0], sizes = [8, 72], strides = [1, 1]} : vector<192x72xf32> to vector<8x72xf32>
    %71 = arith.maximumf %69, %70 : vector<8x72xf32>
    %72 = vector.extract_strided_slice %38 {offsets = [176, 0], sizes = [8, 72], strides = [1, 1]} : vector<192x72xf32> to vector<8x72xf32>
    %73 = vector.extract_strided_slice %38 {offsets = [184, 0], sizes = [8, 72], strides = [1, 1]} : vector<192x72xf32> to vector<8x72xf32>
    %74 = arith.maximumf %72, %73 : vector<8x72xf32>
    %75 = tpu.concatenate %41, %44, %47, %50, %53, %56, %59, %62, %65, %68, %71, %74 in 0 : vector<8x72xf32>, vector<8x72xf32>, vector<8x72xf32>, vector<8x72xf32>, vector<8x72xf32>, vector<8x72xf32>, vector<8x72xf32>, vector<8x72xf32>, vector<8x72xf32>, vector<8x72xf32>, vector<8x72xf32>, vector<8x72xf32> -> vector<96x72xf32>
    %76 = vector.extract_strided_slice %75 {offsets = [0, 0], sizes = [64, 72], strides = [1, 1]} : vector<96x72xf32> to vector<64x72xf32>
    %77 = arith.truncf %76 : vector<64x72xf32> to vector<64x72xbf16>
    %c0_20 = arith.constant 0 : index
    %c0_21 = arith.constant 0 : index
    %c0_22 = arith.constant 0 : index
    %78 = vector.load %arg4[%c0_20, %c0_21, %c0_22] : memref<5x72x128xbf16, #tpu.memory_space<vmem>>, vector<1x72x128xbf16>
    %79 = vector.shape_cast %78 : vector<1x72x128xbf16> to vector<72x128xbf16>
    %cst_23 = arith.constant dense<0.000000e+00> : vector<64x128xf32>
    %80 = tpu.matmul %77, %79, %cst_23 {dimension_numbers = #tpu.dot_dimension_numbers<[1], [0], [0], [1], [0, 0, 1, 1], [], []>} : vector<64x72xbf16>, vector<72x128xbf16>, vector<64x128xf32> -> vector<64x128xf32>
    %81 = vector.extract_strided_slice %75 {offsets = [8, 0], sizes = [64, 72], strides = [1, 1]} : vector<96x72xf32> to vector<64x72xf32>
    %82 = arith.truncf %81 : vector<64x72xf32> to vector<64x72xbf16>
    %c1_24 = arith.constant 1 : index
    %c0_25 = arith.constant 0 : index
    %c0_26 = arith.constant 0 : index
    %83 = vector.load %arg4[%c1_24, %c0_25, %c0_26] : memref<5x72x128xbf16, #tpu.memory_space<vmem>>, vector<1x72x128xbf16>
    %84 = vector.shape_cast %83 : vector<1x72x128xbf16> to vector<72x128xbf16>
    %cst_27 = arith.constant dense<0.000000e+00> : vector<64x128xf32>
    %85 = tpu.matmul %82, %84, %cst_27 {dimension_numbers = #tpu.dot_dimension_numbers<[1], [0], [0], [1], [0, 0, 1, 1], [], []>} : vector<64x72xbf16>, vector<72x128xbf16>, vector<64x128xf32> -> vector<64x128xf32>
    %86 = arith.addf %80, %85 : vector<64x128xf32>
    %87 = vector.extract_strided_slice %75 {offsets = [16, 0], sizes = [64, 72], strides = [1, 1]} : vector<96x72xf32> to vector<64x72xf32>
    %88 = arith.truncf %87 : vector<64x72xf32> to vector<64x72xbf16>
    %c2_28 = arith.constant 2 : index
    %c0_29 = arith.constant 0 : index
    %c0_30 = arith.constant 0 : index
    %89 = vector.load %arg4[%c2_28, %c0_29, %c0_30] : memref<5x72x128xbf16, #tpu.memory_space<vmem>>, vector<1x72x128xbf16>
    %90 = vector.shape_cast %89 : vector<1x72x128xbf16> to vector<72x128xbf16>
    %cst_31 = arith.constant dense<0.000000e+00> : vector<64x128xf32>
    %91 = tpu.matmul %88, %90, %cst_31 {dimension_numbers = #tpu.dot_dimension_numbers<[1], [0], [0], [1], [0, 0, 1, 1], [], []>} : vector<64x72xbf16>, vector<72x128xbf16>, vector<64x128xf32> -> vector<64x128xf32>
    %92 = arith.addf %86, %91 : vector<64x128xf32>
    %93 = vector.extract_strided_slice %75 {offsets = [24, 0], sizes = [64, 72], strides = [1, 1]} : vector<96x72xf32> to vector<64x72xf32>
    %94 = arith.truncf %93 : vector<64x72xf32> to vector<64x72xbf16>
    %c3_32 = arith.constant 3 : index
    %c0_33 = arith.constant 0 : index
    %c0_34 = arith.constant 0 : index
    %95 = vector.load %arg4[%c3_32, %c0_33, %c0_34] : memref<5x72x128xbf16, #tpu.memory_space<vmem>>, vector<1x72x128xbf16>
    %96 = vector.shape_cast %95 : vector<1x72x128xbf16> to vector<72x128xbf16>
    %cst_35 = arith.constant dense<0.000000e+00> : vector<64x128xf32>
    %97 = tpu.matmul %94, %96, %cst_35 {dimension_numbers = #tpu.dot_dimension_numbers<[1], [0], [0], [1], [0, 0, 1, 1], [], []>} : vector<64x72xbf16>, vector<72x128xbf16>, vector<64x128xf32> -> vector<64x128xf32>
    %98 = arith.addf %92, %97 : vector<64x128xf32>
    %99 = vector.extract_strided_slice %75 {offsets = [32, 0], sizes = [64, 72], strides = [1, 1]} : vector<96x72xf32> to vector<64x72xf32>
    %100 = arith.truncf %99 : vector<64x72xf32> to vector<64x72xbf16>
    %c4_36 = arith.constant 4 : index
    %c0_37 = arith.constant 0 : index
    %c0_38 = arith.constant 0 : index
    %101 = vector.load %arg4[%c4_36, %c0_37, %c0_38] : memref<5x72x128xbf16, #tpu.memory_space<vmem>>, vector<1x72x128xbf16>
    %102 = vector.shape_cast %101 : vector<1x72x128xbf16> to vector<72x128xbf16>
    %cst_39 = arith.constant dense<0.000000e+00> : vector<64x128xf32>
    %103 = tpu.matmul %100, %102, %cst_39 {dimension_numbers = #tpu.dot_dimension_numbers<[1], [0], [0], [1], [0, 0, 1, 1], [], []>} : vector<64x72xbf16>, vector<72x128xbf16>, vector<64x128xf32> -> vector<64x128xf32>
    %104 = arith.addf %98, %103 : vector<64x128xf32>
    %c0_40 = arith.constant 0 : index
    %c0_41 = arith.constant 0 : index
    %105 = vector.load %arg5[%c0_40, %c0_41] : memref<1x128xf32, #tpu.memory_space<vmem>>, vector<1x128xf32>
    %106 = vector.broadcast %105 : vector<1x128xf32> to vector<64x128xf32>
    %107 = arith.addf %104, %106 : vector<64x128xf32>
    %cst_42 = arith.constant 0.000000e+00 : f32
    %108 = vector.broadcast %cst_42 : f32 to vector<64x128xf32>
    %109 = arith.maximumf %107, %108 : vector<64x128xf32>
    %110 = vector.extract_strided_slice %109 {offsets = [0, 0], sizes = [64, 64], strides = [1, 1]} : vector<64x128xf32> to vector<64x64xf32>
    %111 = vector.extract_strided_slice %109 {offsets = [0, 64], sizes = [64, 64], strides = [1, 1]} : vector<64x128xf32> to vector<64x64xf32>
    %112 = arith.maximumf %110, %111 : vector<64x64xf32>
    %113 = vector.extract_strided_slice %112 {offsets = [0, 0], sizes = [8, 64], strides = [1, 1]} : vector<64x64xf32> to vector<8x64xf32>
    %114 = vector.extract_strided_slice %112 {offsets = [8, 0], sizes = [8, 64], strides = [1, 1]} : vector<64x64xf32> to vector<8x64xf32>
    %115 = arith.maximumf %113, %114 : vector<8x64xf32>
    %116 = vector.extract_strided_slice %112 {offsets = [16, 0], sizes = [8, 64], strides = [1, 1]} : vector<64x64xf32> to vector<8x64xf32>
    %117 = vector.extract_strided_slice %112 {offsets = [24, 0], sizes = [8, 64], strides = [1, 1]} : vector<64x64xf32> to vector<8x64xf32>
    %118 = arith.maximumf %116, %117 : vector<8x64xf32>
    %119 = vector.extract_strided_slice %112 {offsets = [32, 0], sizes = [8, 64], strides = [1, 1]} : vector<64x64xf32> to vector<8x64xf32>
    %120 = vector.extract_strided_slice %112 {offsets = [40, 0], sizes = [8, 64], strides = [1, 1]} : vector<64x64xf32> to vector<8x64xf32>
    %121 = arith.maximumf %119, %120 : vector<8x64xf32>
    %122 = vector.extract_strided_slice %112 {offsets = [48, 0], sizes = [8, 64], strides = [1, 1]} : vector<64x64xf32> to vector<8x64xf32>
    %123 = vector.extract_strided_slice %112 {offsets = [56, 0], sizes = [8, 64], strides = [1, 1]} : vector<64x64xf32> to vector<8x64xf32>
    %124 = arith.maximumf %122, %123 : vector<8x64xf32>
    %125 = tpu.concatenate %115, %118, %121, %124 in 0 : vector<8x64xf32>, vector<8x64xf32>, vector<8x64xf32>, vector<8x64xf32> -> vector<32x64xf32>
    %126 = vector.extract_strided_slice %125 {offsets = [0, 0], sizes = [8, 64], strides = [1, 1]} : vector<32x64xf32> to vector<8x64xf32>
    %127 = vector.extract_strided_slice %125 {offsets = [8, 0], sizes = [8, 64], strides = [1, 1]} : vector<32x64xf32> to vector<8x64xf32>
    %128 = vector.extract_strided_slice %125 {offsets = [16, 0], sizes = [8, 64], strides = [1, 1]} : vector<32x64xf32> to vector<8x64xf32>
    %129 = vector.extract_strided_slice %125 {offsets = [24, 0], sizes = [8, 64], strides = [1, 1]} : vector<32x64xf32> to vector<8x64xf32>
    %130 = tpu.concatenate %126, %127, %128, %129 in 1 : vector<8x64xf32>, vector<8x64xf32>, vector<8x64xf32>, vector<8x64xf32> -> vector<8x256xf32>
    %131 = arith.truncf %130 : vector<8x256xf32> to vector<8x256xbf16>
    %c0_43 = arith.constant 0 : index
    %c0_44 = arith.constant 0 : index
    %132 = vector.load %arg6[%c0_43, %c0_44] : memref<256x120xbf16, #tpu.memory_space<vmem>>, vector<256x120xbf16>
    %cst_45 = arith.constant dense<0.000000e+00> : vector<8x120xf32>
    %133 = tpu.matmul %131, %132, %cst_45 {dimension_numbers = #tpu.dot_dimension_numbers<[1], [0], [0], [1], [0, 0, 1, 1], [], []>} : vector<8x256xbf16>, vector<256x120xbf16>, vector<8x120xf32> -> vector<8x120xf32>
    %c0_46 = arith.constant 0 : index
    %c0_47 = arith.constant 0 : index
    %134 = vector.load %arg7[%c0_46, %c0_47] : memref<1x120xf32, #tpu.memory_space<vmem>>, vector<1x120xf32>
    %135 = vector.broadcast %134 : vector<1x120xf32> to vector<8x120xf32>
    %136 = arith.addf %133, %135 : vector<8x120xf32>
    %cst_48 = arith.constant 0.000000e+00 : f32
    %137 = vector.broadcast %cst_48 : f32 to vector<8x120xf32>
    %138 = arith.maximumf %136, %137 : vector<8x120xf32>
    %139 = arith.truncf %138 : vector<8x120xf32> to vector<8x120xbf16>
    %c0_49 = arith.constant 0 : index
    %c0_50 = arith.constant 0 : index
    %140 = vector.load %arg8[%c0_49, %c0_50] : memref<120x84xbf16, #tpu.memory_space<vmem>>, vector<120x84xbf16>
    %cst_51 = arith.constant dense<0.000000e+00> : vector<8x84xf32>
    %141 = tpu.matmul %139, %140, %cst_51 {dimension_numbers = #tpu.dot_dimension_numbers<[1], [0], [0], [1], [0, 0, 1, 1], [], []>} : vector<8x120xbf16>, vector<120x84xbf16>, vector<8x84xf32> -> vector<8x84xf32>
    %c0_52 = arith.constant 0 : index
    %c0_53 = arith.constant 0 : index
    %142 = vector.load %arg9[%c0_52, %c0_53] : memref<1x84xf32, #tpu.memory_space<vmem>>, vector<1x84xf32>
    %143 = vector.broadcast %142 : vector<1x84xf32> to vector<8x84xf32>
    %144 = arith.addf %141, %143 : vector<8x84xf32>
    %cst_54 = arith.constant 0.000000e+00 : f32
    %145 = vector.broadcast %cst_54 : f32 to vector<8x84xf32>
    %146 = arith.maximumf %144, %145 : vector<8x84xf32>
    %147 = arith.truncf %146 : vector<8x84xf32> to vector<8x84xbf16>
    %c0_55 = arith.constant 0 : index
    %c0_56 = arith.constant 0 : index
    %148 = vector.load %arg10[%c0_55, %c0_56] : memref<84x10xbf16, #tpu.memory_space<vmem>>, vector<84x10xbf16>
    %cst_57 = arith.constant dense<0.000000e+00> : vector<8x10xf32>
    %149 = tpu.matmul %147, %148, %cst_57 {dimension_numbers = #tpu.dot_dimension_numbers<[1], [0], [0], [1], [0, 0, 1, 1], [], []>} : vector<8x84xbf16>, vector<84x10xbf16>, vector<8x10xf32> -> vector<8x10xf32>
    %c0_58 = arith.constant 0 : index
    %c0_59 = arith.constant 0 : index
    %150 = vector.load %arg11[%c0_58, %c0_59] : memref<1x10xf32, #tpu.memory_space<vmem>>, vector<1x10xf32>
    %151 = vector.broadcast %150 : vector<1x10xf32> to vector<8x10xf32>
    %152 = arith.addf %149, %151 : vector<8x10xf32>
    %c0_60 = arith.constant 0 : index
    %c0_61 = arith.constant 0 : index
    %153 = vector.load %arg12[%c0_60, %c0_61] : memref<8x10xf32, #tpu.memory_space<vmem>>, vector<8x10xf32>
    tpu.vector_store %arg12[%c0_60, %c0_61], %152 {strides = array<i32>} : memref<8x10xf32, #tpu.memory_space<vmem>>, vector<8x10xf32>,
    return
  }
  func.func @transform_0(%arg0: i32) -> (i32, i32, i32) {
    %c0_i32 = arith.constant 0 : i32
    %c0_i32_0 = arith.constant 0 : i32
    %c0_i32_1 = arith.constant 0 : i32
    return %arg0, %c0_i32, %c0_i32_0 : i32, i32, i32
  }
  func.func @transform_1(%arg0: i32) -> (i32, i32, i32) {
    %c0_i32 = arith.constant 0 : i32
    %c0_i32_0 = arith.constant 0 : i32
    %c0_i32_1 = arith.constant 0 : i32
    %c0_i32_2 = arith.constant 0 : i32
    return %c0_i32, %c0_i32_0, %c0_i32_1 : i32, i32, i32
  }
  func.func @transform_2(%arg0: i32) -> (i32, i32) {
    %c0_i32 = arith.constant 0 : i32
    %c0_i32_0 = arith.constant 0 : i32
    %c0_i32_1 = arith.constant 0 : i32
    return %c0_i32, %c0_i32_0 : i32, i32
  }
  func.func @transform_3(%arg0: i32) -> (i32, i32, i32) {
    %c0_i32 = arith.constant 0 : i32
    %c0_i32_0 = arith.constant 0 : i32
    %c0_i32_1 = arith.constant 0 : i32
    %c0_i32_2 = arith.constant 0 : i32
    return %c0_i32, %c0_i32_0, %c0_i32_1 : i32, i32, i32
  }
  func.func @transform_4(%arg0: i32) -> (i32, i32) {
    %c0_i32 = arith.constant 0 : i32
    %c0_i32_0 = arith.constant 0 : i32
    %c0_i32_1 = arith.constant 0 : i32
    return %c0_i32, %c0_i32_0 : i32, i32
  }
  func.func @transform_5(%arg0: i32) -> (i32, i32) {
    %c0_i32 = arith.constant 0 : i32
    %c0_i32_0 = arith.constant 0 : i32
    %c0_i32_1 = arith.constant 0 : i32
    return %c0_i32, %c0_i32_0 : i32, i32
  }
  func.func @transform_6(%arg0: i32) -> (i32, i32) {
    %c0_i32 = arith.constant 0 : i32
    %c0_i32_0 = arith.constant 0 : i32
    %c0_i32_1 = arith.constant 0 : i32
    return %c0_i32, %c0_i32_0 : i32, i32
  }
  func.func @transform_7(%arg0: i32) -> (i32, i32) {
    %c0_i32 = arith.constant 0 : i32
    %c0_i32_0 = arith.constant 0 : i32
    %c0_i32_1 = arith.constant 0 : i32
    return %c0_i32, %c0_i32_0 : i32, i32
  }
  func.func @transform_8(%arg0: i32) -> (i32, i32) {
    %c0_i32 = arith.constant 0 : i32
    %c0_i32_0 = arith.constant 0 : i32
    %c0_i32_1 = arith.constant 0 : i32
    return %c0_i32, %c0_i32_0 : i32, i32
  }
  func.func @transform_9(%arg0: i32) -> (i32, i32) {
    %c0_i32 = arith.constant 0 : i32
    %c0_i32_0 = arith.constant 0 : i32
    %c0_i32_1 = arith.constant 0 : i32
    return %c0_i32, %c0_i32_0 : i32, i32
  }
  func.func @transform_10(%arg0: i32) -> (i32, i32) {
    %c0_i32 = arith.constant 0 : i32
    %c0_i32_0 = arith.constant 0 : i32
    %c0_i32_1 = arith.constant 0 : i32
    return %c0_i32, %c0_i32_0 : i32, i32
  }
  func.func @transform_11(%arg0: i32) -> (i32, i32) {
    %c0_i32 = arith.constant 0 : i32
    %c0_i32_0 = arith.constant 0 : i32
    return %arg0, %c0_i32 : i32, i32
  }
}

</mosaic_0001>

<llo_original>
// kernel: tile.13
$region0: #{tile.13}
  #allocation0 [shape = 's32[1]{0}', space=sflag, size = 0x4, scoped, tag = 'scoped memory for tile.13']
  %s0 = inlined_call_operand.vmem [shape: f32[6], index: 0, kind: input, shape index: {}]
  %s1 = inlined_call_operand.vmem [shape: f32[24,6], index: 1, kind: output, shape index: {}]
  // Predicated region
  $region2: #{tile.13} parent=0 // pred_check
    _
  $region3: #{tile.13} parent=0 // pred_check_branch
    %3 = sbr.rel (0) target = $region5
  $region4: #{tile.13} parent=0 // pred_region
    _
  $region5: #{tile.13} parent=0 // pred_fallthru
    _
  %v4 = vld [vmem:[%s0] ss:$0 sm:$0xff]
  %5 = vst [vmem:[%s1] sm:$0xff] %v4
  %s6 = scalar_lea.vmem %s1, 8
  %7 = vst [vmem:[%s6] sm:$0xff] %v4
  %s8 = scalar_lea.vmem %s1, 16
  %9 = vst [vmem:[%s8] sm:$0xff] %v4

// kernel: tile.14
$region0: #{tile.14}
  %s0 = inlined_call_operand.vmem [shape: f32[24,6], index: 0, kind: input, shape index: {}]
  %s1 = inlined_call_operand.vmem [shape: f32[1,144], index: 1, kind: output, shape index: {}]
  $region1: #{tile.14} parent=0
    #allocation0 [shape = 'u8[8192]{0}', space=vmem, size = 0x2000, scoped, tag = 'scoped mem for output reshape']
    %v2 = vld [vmem:[%s0] sm:$0x1]
    %vm3 = vcmask 48128
    %4 = vst.msk [vmem:[#allocation0] sm:$0x1] %vm3, %v2
    %s5 = scalar_lea.vmem %s0, 21
    %v6 = vld [vmem:[%s5] sm:$0x1]
    %s7 = scalar_lea.vmem %s0, 21
    %v8 = vld [vmem:[%s7] sm:$0x1]
    %vm9 = vcmask 15360
    %v10 = vsel %vm9, %v8, %v6
    %11 = vrot.lane.b32.xlu0 %v10, 126
    %v12 = vpop.permute.xlu0 %11
    %vm13 = vcmask 31744
    %s14 = scalar_lea.vmem [#allocation0], 8
    %15 = vst.msk [vmem:[%s14] sm:$0x1] %vm13, %v12
    %vm16 = vcmask 1048560
    %17 = vst.msk [vmem:[#allocation0] sm:$0x1] %vm16, %v12
    %s18 = scalar_lea.vmem %s0, 20
    %v19 = vld [vmem:[%s18] sm:$0x1]
    %20 = vrot.lane.b32.xlu0 %v19, 120
    %v21 = vpop.permute.xlu0 %20
    %vm22 = vcmask 1032128
    %23 = vst.msk [vmem:[#allocation0] sm:$0x1] %vm22, %v21
    %s24 = scalar_lea.vmem %s0, 19
    %v25 = vld [vmem:[%s24] sm:$0x1]
    %26 = vrot.lane.b32.xlu0 %v25, 114
    %v27 = vpop.permute.xlu0 %26
    %vm28 = vcmask 982928
    %29 = vst.msk [vmem:[#allocation0] sm:$0x1] %vm28, %v27
    %s30 = scalar_lea.vmem %s0, 18
    %v31 = vld [vmem:[%s30] sm:$0x1]
    %32 = vrot.lane.b32.xlu0 %v31, 108
    %v33 = vpop.permute.xlu0 %32
    %vm34 = vcmask 933728
    %35 = vst.msk [vmem:[#allocation0] sm:$0x1] %vm34, %v33
    %s36 = scalar_lea.vmem %s0, 17
    %v37 = vld [vmem:[%s36] sm:$0x1]
    %38 = vrot.lane.b32.xlu0 %v37, 102
    %v39 = vpop.permute.xlu0 %38
    %vm40 = vcmask 884528
    %41 = vst.msk [vmem:[#allocation0] sm:$0x1] %vm40, %v39
    %s42 = scalar_lea.vmem %s0, 16
    %v43 = vld [vmem:[%s42] sm:$0x1]
    %44 = vrot.lane.b32.xlu0 %v43, 96
    %v45 = vpop.permute.xlu0 %44
    %vm46 = vcmask 835328
    %47 = vst.msk [vmem:[#allocation0] sm:$0x1] %vm46, %v45
    %s48 = scalar_lea.vmem %s0, 15
    %v49 = vld [vmem:[%s48] sm:$0x1]
    %50 = vrot.lane.b32.xlu0 %v49, 90
    %v51 = vpop.permute.xlu0 %50
    %vm52 = vcmask 786128
    %53 = vst.msk [vmem:[#allocation0] sm:$0x1] %vm52, %v51
    %s54 = scalar_lea.vmem %s0, 14
    %v55 = vld [vmem:[%s54] sm:$0x1]
    %56 = vrot.lane.b32.xlu0 %v55, 84
    %v57 = vpop.permute.xlu0 %56
    %vm58 = vcmask 736928
    %59 = vst.msk [vmem:[#allocation0] sm:$0x1] %vm58, %v57
    %s60 = scalar_lea.vmem %s0, 13
    %v61 = vld [vmem:[%s60] sm:$0x1]
    %62 = vrot.lane.b32.xlu0 %v61, 78
    %v63 = vpop.permute.xlu0 %62
    %vm64 = vcmask 687728
    %65 = vst.msk [vmem:[#allocation0] sm:$0x1] %vm64, %v63
    %s66 = scalar_lea.vmem %s0, 12
    %v67 = vld [vmem:[%s66] sm:$0x1]
    %68 = vrot.lane.b32.xlu0 %v67, 72
    %v69 = vpop.permute.xlu0 %68
    %vm70 = vcmask 638528
    %71 = vst.msk [vmem:[#allocation0] sm:$0x1] %vm70, %v69
    %s72 = scalar_lea.vmem %s0, 11
    %v73 = vld [vmem:[%s72] sm:$0x1]
    %74 = vrot.lane.b32.xlu0 %v73, 66
    %v75 = vpop.permute.xlu0 %74
    %vm76 = vcmask 589328
    %77 = vst.msk [vmem:[#allocation0] sm:$0x1] %vm76, %v75
    %s78 = scalar_lea.vmem %s0, 10
    %v79 = vld [vmem:[%s78] sm:$0x1]
    %80 = vrot.lane.b32.xlu0 %v79, 60
    %v81 = vpop.permute.xlu0 %80
    %vm82 = vcmask 540128
    %83 = vst.msk [vmem:[#allocation0] sm:$0x1] %vm82, %v81
    %s84 = scalar_lea.vmem %s0, 9
    %v85 = vld [vmem:[%s84] sm:$0x1]
    %86 = vrot.lane.b32.xlu0 %v85, 54
    %v87 = vpop.permute.xlu0 %86
    %vm88 = vcmask 490928
    %89 = vst.msk [vmem:[#allocation0] sm:$0x1] %vm88, %v87
    %s90 = scalar_lea.vmem %s0, 8
    %v91 = vld [vmem:[%s90] sm:$0x1]
    %92 = vrot.lane.b32.xlu0 %v91, 48
    %v93 = vpop.permute.xlu0 %92
    %vm94 = vcmask 441728
    %95 = vst.msk [vmem:[#allocation0] sm:$0x1] %vm94, %v93
    %s96 = scalar_lea.vmem %s0, 7
    %v97 = vld [vmem:[%s96] sm:$0x1]
    %98 = vrot.lane.b32.xlu0 %v97, 42
    %v99 = vpop.permute.xlu0 %98
    %vm100 = vcmask 392528
    %101 = vst.msk [vmem:[#allocation0] sm:$0x1] %vm100, %v99
    %s102 = scalar_lea.vmem %s0, 6
    %v103 = vld [vmem:[%s102] sm:$0x1]
    %104 = vrot.lane.b32.xlu0 %v103, 36
    %v105 = vpop.permute.xlu0 %104
    %vm106 = vcmask 343328
    %107 = vst.msk [vmem:[#allocation0] sm:$0x1] %vm106, %v105
    %s108 = scalar_lea.vmem %s0, 5
    %v109 = vld [vmem:[%s108] sm:$0x1]
    %110 = vrot.lane.b32.xlu0 %v109, 30
    %v111 = vpop.permute.xlu0 %110
    %vm112 = vcmask 294128
    %113 = vst.msk [vmem:[#allocation0] sm:$0x1] %vm112, %v111
    %s114 = scalar_lea.vmem %s0, 4
    %v115 = vld [vmem:[%s114] sm:$0x1]
    %116 = vrot.lane.b32.xlu0 %v115, 24
    %v117 = vpop.permute.xlu0 %116
    %vm118 = vcmask 244928
    %119 = vst.msk [vmem:[#allocation0] sm:$0x1] %vm118, %v117
    %s120 = scalar_lea.vmem %s0, 3
    %v121 = vld [vmem:[%s120] sm:$0x1]
    %122 = vrot.lane.b32.xlu0 %v121, 18
    %v123 = vpop.permute.xlu0 %122
    %vm124 = vcmask 195728
    %125 = vst.msk [vmem:[#allocation0] sm:$0x1] %vm124, %v123
    %s126 = scalar_lea.vmem %s0, 2
    %v127 = vld [vmem:[%s126] sm:$0x1]
    %128 = vrot.lane.b32.xlu0 %v127, 12
    %v129 = vpop.permute.xlu0 %128
    %vm130 = vcmask 146528
    %131 = vst.msk [vmem:[#allocation0] sm:$0x1] %vm130, %v129
    %s132 = scalar_lea.vmem %s0, 23
    %v133 = vld [vmem:[%s132] sm:$0x1]
    %134 = vrot.lane.b32.xlu0 %v133, 10
    %v135 = vpop.permute.xlu0 %134
    %vm136 = vcmask 130128
    %s137 = scalar_lea.vmem [#allocation0], 8
    %138 = vst.msk [vmem:[%s137] sm:$0x1] %vm136, %v135
    %s139 = scalar_lea.vmem %s0, 1
    %v140 = vld [vmem:[%s139] sm:$0x1]
    %141 = vrot.lane.b32.xlu0 %v140, 6
    %v142 = vpop.permute.xlu0 %141
    %vm143 = vcmask 97328
    %144 = vst.msk [vmem:[#allocation0] sm:$0x1] %vm143, %v142
    %s145 = scalar_lea.vmem %s0, 22
    %v146 = vld [vmem:[%s145] sm:$0x1]
    %147 = vrot.lane.b32.xlu0 %v146, 4
    %v148 = vpop.permute.xlu0 %147
    %vm149 = vcmask 80928
    %s150 = scalar_lea.vmem [#allocation0], 8
    %151 = vst.msk [vmem:[%s150] sm:$0x1] %vm149, %v148
    %s153 = ssub.s32 2, 1
    %v154 = vld [vmem:[#allocation0] sm:%s153]
    %s156 = ssub.s32 2, 1
    %157 = vst [vmem:[%s1] sm:%s156] %v154
    %s158 = scalar_lea.vmem [#allocation0], 8
    %v159 = vld [vmem:[%s158] sm:%s153]
    %s161 = ssub.s32 2, 1
    %s162 = scalar_lea.vmem %s1, 1
    %163 = vst [vmem:[%s162] sm:%s161] %v159

// kernel: tile.18
$region0: #{tile.18}
  #allocation0 [shape = 's32[1]{0}', space=sflag, size = 0x4, scoped, tag = 'scoped memory for tile.18']
  %s0 = inlined_call_operand.vmem [shape: f32[16], index: 0, kind: input, shape index: {}]
  %s1 = inlined_call_operand.vmem [shape: f32[8,16], index: 1, kind: output, shape index: {}]
  // Predicated region
  $region2: #{tile.18} parent=0 // pred_check
    _
  $region3: #{tile.18} parent=0 // pred_check_branch
    %3 = sbr.rel (0) target = $region5
  $region4: #{tile.18} parent=0 // pred_region
    _
  $region5: #{tile.18} parent=0 // pred_fallthru
    _
  %v4 = vld [vmem:[%s0] ss:$0 sm:$0xff]
  %5 = vst [vmem:[%s1] sm:$0xff] %v4

// kernel: tile.19
$region0: #{tile.19}
  %s0 = inlined_call_operand.vmem [shape: f32[8,16], index: 0, kind: input, shape index: {}]
  %s1 = inlined_call_operand.vmem [shape: f32[1,128], index: 1, kind: output, shape index: {}]
  $region1: #{tile.19} parent=0
    #allocation0 [shape = 'u8[4096]{0}', space=vmem, size = 0x1000, scoped, tag = 'scoped mem for output reshape']
    %v2 = vld [vmem:[%s0] sm:$0x1]
    %vm3 = vcmask 130048
    %4 = vst.msk [vmem:[#allocation0] sm:$0x1] %vm3, %v2
    %s5 = scalar_lea.vmem %s0, 7
    %v6 = vld [vmem:[%s5] sm:$0x1]
    %7 = vrot.lane.b32.xlu0 %v6, 112
    %v8 = vpop.permute.xlu0 %7
    %vm9 = vcmask 1048448
    %10 = vst.msk [vmem:[#allocation0] sm:$0x1] %vm9, %v8
    %s11 = scalar_lea.vmem %s0, 6
    %v12 = vld [vmem:[%s11] sm:$0x1]
    %13 = vrot.lane.b32.xlu0 %v12, 96
    %v14 = vpop.permute.xlu0 %13
    %vm15 = vcmask 917248
    %16 = vst.msk [vmem:[#allocation0] sm:$0x1] %vm15, %v14
    %s17 = scalar_lea.vmem %s0, 5
    %v18 = vld [vmem:[%s17] sm:$0x1]
    %19 = vrot.lane.b32.xlu0 %v18, 80
    %v20 = vpop.permute.xlu0 %19
    %vm21 = vcmask 786048
    %22 = vst.msk [vmem:[#allocation0] sm:$0x1] %vm21, %v20
    %s23 = scalar_lea.vmem %s0, 4
    %v24 = vld [vmem:[%s23] sm:$0x1]
    %25 = vrot.lane.b32.xlu0 %v24, 64
    %v26 = vpop.permute.xlu0 %25
    %vm27 = vcmask 654848
    %28 = vst.msk [vmem:[#allocation0] sm:$0x1] %vm27, %v26
    %s29 = scalar_lea.vmem %s0, 3
    %v30 = vld [vmem:[%s29] sm:$0x1]
    %31 = vrot.lane.b32.xlu0 %v30, 48
    %v32 = vpop.permute.xlu0 %31
    %vm33 = vcmask 523648
    %34 = vst.msk [vmem:[#allocation0] sm:$0x1] %vm33, %v32
    %s35 = scalar_lea.vmem %s0, 2
    %v36 = vld [vmem:[%s35] sm:$0x1]
    %37 = vrot.lane.b32.xlu0 %v36, 32
    %v38 = vpop.permute.xlu0 %37
    %vm39 = vcmask 392448
    %40 = vst.msk [vmem:[#allocation0] sm:$0x1] %vm39, %v38
    %s41 = scalar_lea.vmem %s0, 1
    %v42 = vld [vmem:[%s41] sm:$0x1]
    %43 = vrot.lane.b32.xlu0 %v42, 16
    %v44 = vpop.permute.xlu0 %43
    %vm45 = vcmask 261248
    %46 = vst.msk [vmem:[#allocation0] sm:$0x1] %vm45, %v44
    %s48 = ssub.s32 2, 1
    %v49 = vld [vmem:[#allocation0] sm:%s48]
    %s51 = ssub.s32 2, 1
    %52 = vst [vmem:[%s1] sm:%s51] %v49

// kernel: lenet_forward.1
$region0: #{lenet_forward.1}
  #allocation0 [shape = 'u32[]', space=smem, size = 0x4, offset = 0x4, fixed_abs, tag = 'smem constant byte address 0x4 - core index']
  #allocation1 [shape = 'u32[72,128]{1,0:T(1,128)}', space=vmem, size = 0x9000, scoped, tag = 'internal scratch']
  %s0 = inlined_call_operand.vmem [shape: f32[1,224,28], index: 0, kind: input, shape index: {}]
  %s1 = inlined_call_operand.vmem [shape: bf16[5,28,144], index: 1, kind: input, shape index: {}]
  %s2 = inlined_call_operand.vmem [shape: f32[1,144], index: 2, kind: input, shape index: {}]
  %s3 = inlined_call_operand.vmem [shape: bf16[5,72,128], index: 3, kind: input, shape index: {}]
  %s4 = inlined_call_operand.vmem [shape: f32[1,128], index: 4, kind: input, shape index: {}]
  %s5 = inlined_call_operand.vmem [shape: bf16[256,120], index: 5, kind: input, shape index: {}]
  %s6 = inlined_call_operand.vmem [shape: f32[1,120], index: 6, kind: input, shape index: {}]
  %s7 = inlined_call_operand.vmem [shape: bf16[120,84], index: 7, kind: input, shape index: {}]
  %s8 = inlined_call_operand.vmem [shape: f32[1,84], index: 8, kind: input, shape index: {}]
  %s9 = inlined_call_operand.vmem [shape: bf16[84,10], index: 9, kind: input, shape index: {}]
  %s10 = inlined_call_operand.vmem [shape: f32[1,10], index: 10, kind: input, shape index: {}]
  %s11 = inlined_call_operand.vmem [shape: f32[8,10], index: 11, kind: output, shape index: {}]
  %s12 = sld [smem:[#allocation0]]
  $region54: #{lenet_forward.1} parent=0
    _
  %s14 = ssub.s32 1, %s12
  %s15 = scalar_select 0, %s14, %s12
  // Predicated region
  $region2: #{lenet_forward.1} parent=0 // pred_check
    _
  $region3: #{lenet_forward.1} parent=0 // pred_check_branch
    %17 = sbr.rel (0) target = $region5
  $region4: #{lenet_forward.1} parent=0 // pred_region
    _
  $region5: #{lenet_forward.1} parent=0 // pred_fallthru
    _
  // Predicated region
  $region6: #{lenet_forward.1} parent=0 // pred_check
    _
  $region7: #{lenet_forward.1} parent=0 // pred_check_branch
    %19 = sbr.rel (0) target = $region9
  $region8: #{lenet_forward.1} parent=0 // pred_region
    _
  $region9: #{lenet_forward.1} parent=0 // pred_fallthru
    _
  // Predicated region
  $region10: #{lenet_forward.1} parent=0 // pred_check
    _
  $region11: #{lenet_forward.1} parent=0 // pred_check_branch
    %21 = sbr.rel (0) target = $region13
  $region12: #{lenet_forward.1} parent=0 // pred_region
    _
  $region13: #{lenet_forward.1} parent=0 // pred_fallthru
    _
  // Predicated region
  $region14: #{lenet_forward.1} parent=0 // pred_check
    _
  $region15: #{lenet_forward.1} parent=0 // pred_check_branch
    %23 = sbr.rel (0) target = $region17
  $region16: #{lenet_forward.1} parent=0 // pred_region
    _
  $region17: #{lenet_forward.1} parent=0 // pred_fallthru
    _
  // Predicated region
  $region18: #{lenet_forward.1} parent=0 // pred_check
    _
  $region19: #{lenet_forward.1} parent=0 // pred_check_branch
    %25 = sbr.rel (0) target = $region21
  $region20: #{lenet_forward.1} parent=0 // pred_region
    _
  $region21: #{lenet_forward.1} parent=0 // pred_fallthru
    _
  // Predicated region
  $region22: #{lenet_forward.1} parent=0 // pred_check
    _
  $region23: #{lenet_forward.1} parent=0 // pred_check_branch
    %27 = sbr.rel (0) target = $region25
  $region24: #{lenet_forward.1} parent=0 // pred_region
    _
  $region25: #{lenet_forward.1} parent=0 // pred_fallthru
    _
  // Predicated region
  $region26: #{lenet_forward.1} parent=0 // pred_check
    _
  $region27: #{lenet_forward.1} parent=0 // pred_check_branch
    %29 = sbr.rel (0) target = $region29
  $region28: #{lenet_forward.1} parent=0 // pred_region
    _
  $region29: #{lenet_forward.1} parent=0 // pred_fallthru
    _
  // Predicated region
  $region30: #{lenet_forward.1} parent=0 // pred_check
    _
  $region31: #{lenet_forward.1} parent=0 // pred_check_branch
    %31 = sbr.rel (0) target = $region33
  $region32: #{lenet_forward.1} parent=0 // pred_region
    _
  $region33: #{lenet_forward.1} parent=0 // pred_fallthru
    _
  // Predicated region
  $region34: #{lenet_forward.1} parent=0 // pred_check
    _
  $region35: #{lenet_forward.1} parent=0 // pred_check_branch
    %33 = sbr.rel (0) target = $region37
  $region36: #{lenet_forward.1} parent=0 // pred_region
    _
  $region37: #{lenet_forward.1} parent=0 // pred_fallthru
    _
  // Predicated region
  $region38: #{lenet_forward.1} parent=0 // pred_check
    _
  $region39: #{lenet_forward.1} parent=0 // pred_check_branch
    %35 = sbr.rel (0) target = $region41
  $region40: #{lenet_forward.1} parent=0 // pred_region
    _
  $region41: #{lenet_forward.1} parent=0 // pred_fallthru
    _
  // Predicated region
  $region42: #{lenet_forward.1} parent=0 // pred_check
    _
  $region43: #{lenet_forward.1} parent=0 // pred_check_branch
    %37 = sbr.rel (0) target = $region45
  $region44: #{lenet_forward.1} parent=0 // pred_region
    _
  $region45: #{lenet_forward.1} parent=0 // pred_fallthru
    _
  %v39 = vld [vmem:[%s0] sm:$0xff]
  %v40 = vld [vmem:[%s0 + $0x8] sm:$0xff]
  %v41 = vld [vmem:[%s0 + $0x10] sm:$0xff]
  %v42 = vld [vmem:[%s0 + $0x18] sm:$0xff]
  %v43 = vld [vmem:[%s0 + $0x20] sm:$0xff]
  %v44 = vld [vmem:[%s0 + $0x28] sm:$0xff]
  %v45 = vld [vmem:[%s0 + $0x30] sm:$0xff]
  %v46 = vld [vmem:[%s0 + $0x38] sm:$0xff]
  %v47 = vld [vmem:[%s0 + $0x40] sm:$0xff]
  %v48 = vld [vmem:[%s0 + $0x48] sm:$0xff]
  %v49 = vld [vmem:[%s0 + $0x50] sm:$0xff]
  %v50 = vld [vmem:[%s0 + $0x58] sm:$0xff]
  %v51 = vld [vmem:[%s0 + $0x60] sm:$0xff]
  %v52 = vld [vmem:[%s0 + $0x68] sm:$0xff]
  %v53 = vld [vmem:[%s0 + $0x70] sm:$0xff]
  %v54 = vld [vmem:[%s0 + $0x78] sm:$0xff]
  %v55 = vld [vmem:[%s0 + $0x80] sm:$0xff]
  %v56 = vld [vmem:[%s0 + $0x88] sm:$0xff]
  %v57 = vld [vmem:[%s0 + $0x90] sm:$0xff]
  %v58 = vld [vmem:[%s0 + $0x98] sm:$0xff]
  %v59 = vld [vmem:[%s0 + $0xa0] sm:$0xff]
  %v60 = vld [vmem:[%s0 + $0xa8] sm:$0xff]
  %v61 = vld [vmem:[%s0 + $0xb0] sm:$0xff]
  %v62 = vld [vmem:[%s0 + $0xb8] sm:$0xff]
  %v63 = vld [vmem:[%s0 + $0xc0] sm:$0xff]
  %v64 = vld [vmem:[%s0 + $0xc8] sm:$0xff]
  %v65 = vld [vmem:[%s0 + $0xd0] sm:$0xff]
  %v66 = vld [vmem:[%s0 + $0xd8] sm:$0xff]
  %v67 = vpack.c.bf16 %v40, %v39
  %v68 = vpack.c.bf16 %v42, %v41
  %v69 = vpack.c.bf16 %v44, %v43
  %v70 = vpack.c.bf16 %v46, %v45
  %v71 = vpack.c.bf16 %v48, %v47
  %v72 = vpack.c.bf16 %v50, %v49
  %v73 = vpack.c.bf16 %v52, %v51
  %v74 = vpack.c.bf16 %v54, %v53
  %v75 = vpack.c.bf16 %v56, %v55
  %v76 = vpack.c.bf16 %v58, %v57
  %v77 = vpack.c.bf16 %v60, %v59
  %v78 = vpack.c.bf16 %v62, %v61
  %v79 = vld [vmem:[%s1] sm:$0xff]
  %v80 = vld [vmem:[%s1 + $0x8] sm:$0xff]
  %v81 = vld [vmem:[%s1 + $0x10] sm:$0xff]
  %v82 = vld [vmem:[%s1 + $0x18] sm:$0x33]
  %v83 = vpack.c.bf16 %v41, %v40
  %v84 = vpack.c.bf16 %v43, %v42
  %v85 = vpack.c.bf16 %v45, %v44
  %v86 = vpack.c.bf16 %v47, %v46
  %v87 = vpack.c.bf16 %v49, %v48
  %v88 = vpack.c.bf16 %v51, %v50
  %v89 = vpack.c.bf16 %v53, %v52
  %v90 = vpack.c.bf16 %v55, %v54
  %v91 = vpack.c.bf16 %v57, %v56
  %v92 = vpack.c.bf16 %v59, %v58
  %v93 = vpack.c.bf16 %v61, %v60
  %v94 = vpack.c.bf16 %v63, %v62
  %s95 = scalar_lea.vmem %s1, 32
  %v96 = vld [vmem:[%s95] sm:$0xff]
  %v97 = vld [vmem:[%s95 + $0x8] sm:$0xff]
  %v98 = vld [vmem:[%s95 + $0x10] sm:$0xff]
  %v99 = vld [vmem:[%s95 + $0x18] sm:$0x33]
  %v104 = vunpack.c.l.b16 %v96
  %v105 = vunpack.c.h.b16 %v96
  %v106 = vunpack.c.l.b16 %v97
  %v107 = vunpack.c.h.b16 %v97
  %v108 = vunpack.c.l.b16 %v98
  %v109 = vunpack.c.h.b16 %v98
  %v110 = vunpack.c.l.b16 %v99
  %v111 = vunpack.c.h.b16 %v99
  %v112 = vpack.c.b16 %v106, %v104
  %v113 = vpack.c.b16 %v107, %v105
  %v114 = vpack.c.b16 %v110, %v108
  %v115 = vpack.c.b16 %v111, %v109
  %vm118 = vcmask 228352
  %v120 = vsel %vm118, %v83, 0
  %v123 = vsel %vm118, %v84, 0
  %v126 = vsel %vm118, %v85, 0
  %v129 = vsel %vm118, %v86, 0
  %v132 = vsel %vm118, %v87, 0
  %v135 = vsel %vm118, %v88, 0
  %v138 = vsel %vm118, %v89, 0
  %v141 = vsel %vm118, %v90, 0
  %v144 = vsel %vm118, %v91, 0
  %v147 = vsel %vm118, %v92, 0
  %v150 = vsel %vm118, %v93, 0
  %v153 = vsel %vm118, %v94, 0
  %vm155 = vcmask 1045504
  %v157 = vsel %vm155, %v114, 0
  %v160 = vsel %vm155, %v115, 0
  %162 = vmatpush.bf16.msra.mxu0 0
  %163 = vmatpush.bf16.msra.mxu0 0
  %164 = vmatpush.bf16.msra.mxu0 0
  %165 = vmatpush.bf16.msra.mxu0 0
  %166 = vmatpush.bf16.msra.mxu0 0
  %167 = vmatpush.bf16.msra.mxu0 0
  %168 = vmatpush.bf16.msra.mxu0 %v157
  %169 = vmatpush.bf16.msra.mxu0 %v112
  %170 = vmatmul.bf16.gmra.mxu0 %v120
  %v171 = vpop.f32.mrf.mxu0
  %v172 = vadd.f32 0.0, %v171
  %v173 = vpop.f32.mrf.mxu0
  %v174 = vadd.f32 0.0, %v173
  %175 = vmatmul.bf16.gmra.mxu0 %v123
  %v176 = vpop.f32.mrf.mxu0
  %v177 = vadd.f32 0.0, %v176
  %v178 = vpop.f32.mrf.mxu0
  %v179 = vadd.f32 0.0, %v178
  %180 = vmatmul.bf16.gmra.mxu0 %v126
  %v181 = vpop.f32.mrf.mxu0
  %v182 = vadd.f32 0.0, %v181
  %v183 = vpop.f32.mrf.mxu0
  %v184 = vadd.f32 0.0, %v183
  %185 = vmatmul.bf16.gmra.mxu0 %v129
  %v186 = vpop.f32.mrf.mxu0
  %v187 = vadd.f32 0.0, %v186
  %v188 = vpop.f32.mrf.mxu0
  %v189 = vadd.f32 0.0, %v188
  %190 = vmatmul.bf16.gmra.mxu0 %v132
  %v191 = vpop.f32.mrf.mxu0
  %v192 = vadd.f32 0.0, %v191
  %v193 = vpop.f32.mrf.mxu0
  %v194 = vadd.f32 0.0, %v193
  %195 = vmatmul.bf16.gmra.mxu0 %v135
  %v196 = vpop.f32.mrf.mxu0
  %v197 = vadd.f32 0.0, %v196
  %v198 = vpop.f32.mrf.mxu0
  %v199 = vadd.f32 0.0, %v198
  %200 = vmatmul.bf16.gmra.mxu0 %v138
  %v201 = vpop.f32.mrf.mxu0
  %v202 = vadd.f32 0.0, %v201
  %v203 = vpop.f32.mrf.mxu0
  %v204 = vadd.f32 0.0, %v203
  %205 = vmatmul.bf16.gmra.mxu0 %v141
  %v206 = vpop.f32.mrf.mxu0
  %v207 = vadd.f32 0.0, %v206
  %v208 = vpop.f32.mrf.mxu0
  %v209 = vadd.f32 0.0, %v208
  %210 = vmatmul.bf16.gmra.mxu0 %v144
  %v211 = vpop.f32.mrf.mxu0
  %v212 = vadd.f32 0.0, %v211
  %v213 = vpop.f32.mrf.mxu0
  %v214 = vadd.f32 0.0, %v213
  %215 = vmatmul.bf16.gmra.mxu0 %v147
  %v216 = vpop.f32.mrf.mxu0
  %v217 = vadd.f32 0.0, %v216
  %v218 = vpop.f32.mrf.mxu0
  %v219 = vadd.f32 0.0, %v218
  %220 = vmatmul.bf16.gmra.mxu0 %v150
  %v221 = vpop.f32.mrf.mxu0
  %v222 = vadd.f32 0.0, %v221
  %v223 = vpop.f32.mrf.mxu0
  %v224 = vadd.f32 0.0, %v223
  %225 = vmatmul.bf16.gmra.mxu0 %v153
  %v226 = vpop.f32.mrf.mxu0
  %v227 = vadd.f32 0.0, %v226
  %v228 = vpop.f32.mrf.mxu0
  %v229 = vadd.f32 0.0, %v228
  %230 = vdwg.mxu0
  %231 = vmatpush.bf16.msra.mxu0 0
  %232 = vmatpush.bf16.msra.mxu0 0
  %233 = vmatpush.bf16.msra.mxu0 0
  %234 = vmatpush.bf16.msra.mxu0 0
  %235 = vmatpush.bf16.msra.mxu0 0
  %236 = vmatpush.bf16.msra.mxu0 0
  %237 = vmatpush.bf16.msra.mxu0 %v160
  %238 = vmatpush.bf16.msra.mxu0 %v113
  %239 = vmatmul.bf16.gmra.mxu0 %v120
  %v240 = vpop.f32.mrf.mxu0
  %v241 = vadd.f32 0.0, %v240
  %v242 = vpop.f32.mrf.mxu0
  %v243 = vadd.f32 0.0, %v242
  %244 = vmatmul.bf16.gmra.mxu0 %v123
  %v245 = vpop.f32.mrf.mxu0
  %v246 = vadd.f32 0.0, %v245
  %v247 = vpop.f32.mrf.mxu0
  %v248 = vadd.f32 0.0, %v247
  %249 = vmatmul.bf16.gmra.mxu0 %v126
  %v250 = vpop.f32.mrf.mxu0
  %v251 = vadd.f32 0.0, %v250
  %v252 = vpop.f32.mrf.mxu0
  %v253 = vadd.f32 0.0, %v252
  %254 = vmatmul.bf16.gmra.mxu0 %v129
  %v255 = vpop.f32.mrf.mxu0
  %v256 = vadd.f32 0.0, %v255
  %v257 = vpop.f32.mrf.mxu0
  %v258 = vadd.f32 0.0, %v257
  %259 = vmatmul.bf16.gmra.mxu0 %v132
  %v260 = vpop.f32.mrf.mxu0
  %v261 = vadd.f32 0.0, %v260
  %v262 = vpop.f32.mrf.mxu0
  %v263 = vadd.f32 0.0, %v262
  %264 = vmatmul.bf16.gmra.mxu0 %v135
  %v265 = vpop.f32.mrf.mxu0
  %v266 = vadd.f32 0.0, %v265
  %v267 = vpop.f32.mrf.mxu0
  %v268 = vadd.f32 0.0, %v267
  %269 = vmatmul.bf16.gmra.mxu0 %v138
  %v270 = vpop.f32.mrf.mxu0
  %v271 = vadd.f32 0.0, %v270
  %v272 = vpop.f32.mrf.mxu0
  %v273 = vadd.f32 0.0, %v272
  %274 = vmatmul.bf16.gmra.mxu0 %v141
  %v275 = vpop.f32.mrf.mxu0
  %v276 = vadd.f32 0.0, %v275
  %v277 = vpop.f32.mrf.mxu0
  %v278 = vadd.f32 0.0, %v277
  %279 = vmatmul.bf16.gmra.mxu0 %v144
  %v280 = vpop.f32.mrf.mxu0
  %v281 = vadd.f32 0.0, %v280
  %v282 = vpop.f32.mrf.mxu0
  %v283 = vadd.f32 0.0, %v282
  %284 = vmatmul.bf16.gmra.mxu0 %v147
  %v285 = vpop.f32.mrf.mxu0
  %v286 = vadd.f32 0.0, %v285
  %v287 = vpop.f32.mrf.mxu0
  %v288 = vadd.f32 0.0, %v287
  %289 = vmatmul.bf16.gmra.mxu0 %v150
  %v290 = vpop.f32.mrf.mxu0
  %v291 = vadd.f32 0.0, %v290
  %v292 = vpop.f32.mrf.mxu0
  %v293 = vadd.f32 0.0, %v292
  %294 = vmatmul.bf16.gmra.mxu0 %v153
  %v295 = vpop.f32.mrf.mxu0
  %v296 = vadd.f32 0.0, %v295
  %v297 = vpop.f32.mrf.mxu0
  %v298 = vadd.f32 0.0, %v297
  %299 = vdwg.mxu0
  %v304 = vunpack.c.l.b16 %v79
  %v305 = vunpack.c.h.b16 %v79
  %v306 = vunpack.c.l.b16 %v80
  %v307 = vunpack.c.h.b16 %v80
  %v308 = vunpack.c.l.b16 %v81
  %v309 = vunpack.c.h.b16 %v81
  %v310 = vunpack.c.l.b16 %v82
  %v311 = vunpack.c.h.b16 %v82
  %v312 = vpack.c.b16 %v306, %v304
  %v313 = vpack.c.b16 %v307, %v305
  %v314 = vpack.c.b16 %v310, %v308
  %v315 = vpack.c.b16 %v311, %v309
  %v319 = vsel %vm118, %v67, 0
  %v322 = vsel %vm118, %v68, 0
  %v325 = vsel %vm118, %v69, 0
  %v328 = vsel %vm118, %v70, 0
  %v331 = vsel %vm118, %v71, 0
  %v334 = vsel %vm118, %v72, 0
  %v337 = vsel %vm118, %v73, 0
  %v340 = vsel %vm118, %v74, 0
  %v343 = vsel %vm118, %v75, 0
  %v346 = vsel %vm118, %v76, 0
  %v349 = vsel %vm118, %v77, 0
  %v352 = vsel %vm118, %v78, 0
  %v355 = vsel %vm155, %v314, 0
  %v358 = vsel %vm155, %v315, 0
  %360 = vmatpush.bf16.msra.mxu0 0
  %361 = vmatpush.bf16.msra.mxu0 0
  %362 = vmatpush.bf16.msra.mxu0 0
  %363 = vmatpush.bf16.msra.mxu0 0
  %364 = vmatpush.bf16.msra.mxu0 0
  %365 = vmatpush.bf16.msra.mxu0 0
  %366 = vmatpush.bf16.msra.mxu0 %v355
  %367 = vmatpush.bf16.msra.mxu0 %v312
  %368 = vmatmul.bf16.gmra.mxu0 %v319
  %v369 = vpop.f32.mrf.mxu0
  %v370 = vadd.f32 %v172, %v369
  %v371 = vpop.f32.mrf.mxu0
  %v372 = vadd.f32 %v174, %v371
  %373 = vmatmul.bf16.gmra.mxu0 %v322
  %v374 = vpop.f32.mrf.mxu0
  %v375 = vadd.f32 %v177, %v374
  %v376 = vpop.f32.mrf.mxu0
  %v377 = vadd.f32 %v179, %v376
  %378 = vmatmul.bf16.gmra.mxu0 %v325
  %v379 = vpop.f32.mrf.mxu0
  %v380 = vadd.f32 %v182, %v379
  %v381 = vpop.f32.mrf.mxu0
  %v382 = vadd.f32 %v184, %v381
  %383 = vmatmul.bf16.gmra.mxu0 %v328
  %v384 = vpop.f32.mrf.mxu0
  %v385 = vadd.f32 %v187, %v384
  %v386 = vpop.f32.mrf.mxu0
  %v387 = vadd.f32 %v189, %v386
  %388 = vmatmul.bf16.gmra.mxu0 %v331
  %v389 = vpop.f32.mrf.mxu0
  %v390 = vadd.f32 %v192, %v389
  %v391 = vpop.f32.mrf.mxu0
  %v392 = vadd.f32 %v194, %v391
  %393 = vmatmul.bf16.gmra.mxu0 %v334
  %v394 = vpop.f32.mrf.mxu0
  %v395 = vadd.f32 %v197, %v394
  %v396 = vpop.f32.mrf.mxu0
  %v397 = vadd.f32 %v199, %v396
  %398 = vmatmul.bf16.gmra.mxu0 %v337
  %v399 = vpop.f32.mrf.mxu0
  %v400 = vadd.f32 %v202, %v399
  %v401 = vpop.f32.mrf.mxu0
  %v402 = vadd.f32 %v204, %v401
  %403 = vmatmul.bf16.gmra.mxu0 %v340
  %v404 = vpop.f32.mrf.mxu0
  %v405 = vadd.f32 %v207, %v404
  %v406 = vpop.f32.mrf.mxu0
  %v407 = vadd.f32 %v209, %v406
  %408 = vmatmul.bf16.gmra.mxu0 %v343
  %v409 = vpop.f32.mrf.mxu0
  %v410 = vadd.f32 %v212, %v409
  %v411 = vpop.f32.mrf.mxu0
  %v412 = vadd.f32 %v214, %v411
  %413 = vmatmul.bf16.gmra.mxu0 %v346
  %v414 = vpop.f32.mrf.mxu0
  %v415 = vadd.f32 %v217, %v414
  %v416 = vpop.f32.mrf.mxu0
  %v417 = vadd.f32 %v219, %v416
  %418 = vmatmul.bf16.gmra.mxu0 %v349
  %v419 = vpop.f32.mrf.mxu0
  %v420 = vadd.f32 %v222, %v419
  %v421 = vpop.f32.mrf.mxu0
  %v422 = vadd.f32 %v224, %v421
  %423 = vmatmul.bf16.gmra.mxu0 %v352
  %v424 = vpop.f32.mrf.mxu0
  %v425 = vadd.f32 %v227, %v424
  %v426 = vpop.f32.mrf.mxu0
  %v427 = vadd.f32 %v229, %v426
  %428 = vdwg.mxu0
  %429 = vmatpush.bf16.msra.mxu0 0
  %430 = vmatpush.bf16.msra.mxu0 0
  %431 = vmatpush.bf16.msra.mxu0 0
  %432 = vmatpush.bf16.msra.mxu0 0
  %433 = vmatpush.bf16.msra.mxu0 0
  %434 = vmatpush.bf16.msra.mxu0 0
  %435 = vmatpush.bf16.msra.mxu0 %v358
  %436 = vmatpush.bf16.msra.mxu0 %v313
  %437 = vmatmul.bf16.gmra.mxu0 %v319
  %v438 = vpop.f32.mrf.mxu0
  %v439 = vadd.f32 %v241, %v438
  %v440 = vpop.f32.mrf.mxu0
  %v441 = vadd.f32 %v243, %v440
  %442 = vmatmul.bf16.gmra.mxu0 %v322
  %v443 = vpop.f32.mrf.mxu0
  %v444 = vadd.f32 %v246, %v443
  %v445 = vpop.f32.mrf.mxu0
  %v446 = vadd.f32 %v248, %v445
  %447 = vmatmul.bf16.gmra.mxu0 %v325
  %v448 = vpop.f32.mrf.mxu0
  %v449 = vadd.f32 %v251, %v448
  %v450 = vpop.f32.mrf.mxu0
  %v451 = vadd.f32 %v253, %v450
  %452 = vmatmul.bf16.gmra.mxu0 %v328
  %v453 = vpop.f32.mrf.mxu0
  %v454 = vadd.f32 %v256, %v453
  %v455 = vpop.f32.mrf.mxu0
  %v456 = vadd.f32 %v258, %v455
  %457 = vmatmul.bf16.gmra.mxu0 %v331
  %v458 = vpop.f32.mrf.mxu0
  %v459 = vadd.f32 %v261, %v458
  %v460 = vpop.f32.mrf.mxu0
  %v461 = vadd.f32 %v263, %v460
  %462 = vmatmul.bf16.gmra.mxu0 %v334
  %v463 = vpop.f32.mrf.mxu0
  %v464 = vadd.f32 %v266, %v463
  %v465 = vpop.f32.mrf.mxu0
  %v466 = vadd.f32 %v268, %v465
  %467 = vmatmul.bf16.gmra.mxu0 %v337
  %v468 = vpop.f32.mrf.mxu0
  %v469 = vadd.f32 %v271, %v468
  %v470 = vpop.f32.mrf.mxu0
  %v471 = vadd.f32 %v273, %v470
  %472 = vmatmul.bf16.gmra.mxu0 %v340
  %v473 = vpop.f32.mrf.mxu0
  %v474 = vadd.f32 %v276, %v473
  %v475 = vpop.f32.mrf.mxu0
  %v476 = vadd.f32 %v278, %v475
  %477 = vmatmul.bf16.gmra.mxu0 %v343
  %v478 = vpop.f32.mrf.mxu0
  %v479 = vadd.f32 %v281, %v478
  %v480 = vpop.f32.mrf.mxu0
  %v481 = vadd.f32 %v283, %v480
  %482 = vmatmul.bf16.gmra.mxu0 %v346
  %v483 = vpop.f32.mrf.mxu0
  %v484 = vadd.f32 %v286, %v483
  %v485 = vpop.f32.mrf.mxu0
  %v486 = vadd.f32 %v288, %v485
  %487 = vmatmul.bf16.gmra.mxu0 %v349
  %v488 = vpop.f32.mrf.mxu0
  %v489 = vadd.f32 %v291, %v488
  %v490 = vpop.f32.mrf.mxu0
  %v491 = vadd.f32 %v293, %v490
  %492 = vmatmul.bf16.gmra.mxu0 %v352
  %v493 = vpop.f32.mrf.mxu0
  %v494 = vadd.f32 %v296, %v493
  %v495 = vpop.f32.mrf.mxu0
  %v496 = vadd.f32 %v298, %v495
  %497 = vdwg.mxu0
  %v498 = vpack.c.bf16 %v64, %v63
  %s499 = scalar_lea.vmem %s1, 64
  %v500 = vld [vmem:[%s499] sm:$0xff]
  %v501 = vld [vmem:[%s499 + $0x8] sm:$0xff]
  %v502 = vld [vmem:[%s499 + $0x10] sm:$0xff]
  %v503 = vld [vmem:[%s499 + $0x18] sm:$0x33]
  %v508 = vunpack.c.l.b16 %v500
  %v509 = vunpack.c.h.b16 %v500
  %v510 = vunpack.c.l.b16 %v501
  %v511 = vunpack.c.h.b16 %v501
  %v512 = vunpack.c.l.b16 %v502
  %v513 = vunpack.c.h.b16 %v502
  %v514 = vunpack.c.l.b16 %v503
  %v515 = vunpack.c.h.b16 %v503
  %v516 = vpack.c.b16 %v510, %v508
  %v517 = vpack.c.b16 %v511, %v509
  %v518 = vpack.c.b16 %v514, %v512
  %v519 = vpack.c.b16 %v515, %v513
  %v523 = vsel %vm118, %v498, 0
  %v526 = vsel %vm155, %v518, 0
  %v529 = vsel %vm155, %v519, 0
  %531 = vmatpush.bf16.msra.mxu0 0
  %532 = vmatpush.bf16.msra.mxu0 0
  %533 = vmatpush.bf16.msra.mxu0 0
  %534 = vmatpush.bf16.msra.mxu0 0
  %535 = vmatpush.bf16.msra.mxu0 0
  %536 = vmatpush.bf16.msra.mxu0 0
  %537 = vmatpush.bf16.msra.mxu0 %v526
  %538 = vmatpush.bf16.msra.mxu0 %v516
  %539 = vmatmul.bf16.gmra.mxu0 %v322
  %v540 = vpop.f32.mrf.mxu0
  %v541 = vadd.f32 0.0, %v540
  %v542 = vpop.f32.mrf.mxu0
  %v543 = vadd.f32 0.0, %v542
  %544 = vmatmul.bf16.gmra.mxu0 %v325
  %v545 = vpop.f32.mrf.mxu0
  %v546 = vadd.f32 0.0, %v545
  %v547 = vpop.f32.mrf.mxu0
  %v548 = vadd.f32 0.0, %v547
  %549 = vmatmul.bf16.gmra.mxu0 %v328
  %v550 = vpop.f32.mrf.mxu0
  %v551 = vadd.f32 0.0, %v550
  %v552 = vpop.f32.mrf.mxu0
  %v553 = vadd.f32 0.0, %v552
  %554 = vmatmul.bf16.gmra.mxu0 %v331
  %v555 = vpop.f32.mrf.mxu0
  %v556 = vadd.f32 0.0, %v555
  %v557 = vpop.f32.mrf.mxu0
  %v558 = vadd.f32 0.0, %v557
  %559 = vmatmul.bf16.gmra.mxu0 %v334
  %v560 = vpop.f32.mrf.mxu0
  %v561 = vadd.f32 0.0, %v560
  %v562 = vpop.f32.mrf.mxu0
  %v563 = vadd.f32 0.0, %v562
  %564 = vmatmul.bf16.gmra.mxu0 %v337
  %v565 = vpop.f32.mrf.mxu0
  %v566 = vadd.f32 0.0, %v565
  %v567 = vpop.f32.mrf.mxu0
  %v568 = vadd.f32 0.0, %v567
  %569 = vmatmul.bf16.gmra.mxu0 %v340
  %v570 = vpop.f32.mrf.mxu0
  %v571 = vadd.f32 0.0, %v570
  %v572 = vpop.f32.mrf.mxu0
  %v573 = vadd.f32 0.0, %v572
  %574 = vmatmul.bf16.gmra.mxu0 %v343
  %v575 = vpop.f32.mrf.mxu0
  %v576 = vadd.f32 0.0, %v575
  %v577 = vpop.f32.mrf.mxu0
  %v578 = vadd.f32 0.0, %v577
  %579 = vmatmul.bf16.gmra.mxu0 %v346
  %v580 = vpop.f32.mrf.mxu0
  %v581 = vadd.f32 0.0, %v580
  %v582 = vpop.f32.mrf.mxu0
  %v583 = vadd.f32 0.0, %v582
  %584 = vmatmul.bf16.gmra.mxu0 %v349
  %v585 = vpop.f32.mrf.mxu0
  %v586 = vadd.f32 0.0, %v585
  %v587 = vpop.f32.mrf.mxu0
  %v588 = vadd.f32 0.0, %v587
  %589 = vmatmul.bf16.gmra.mxu0 %v352
  %v590 = vpop.f32.mrf.mxu0
  %v591 = vadd.f32 0.0, %v590
  %v592 = vpop.f32.mrf.mxu0
  %v593 = vadd.f32 0.0, %v592
  %594 = vmatmul.bf16.gmra.mxu0 %v523
  %v595 = vpop.f32.mrf.mxu0
  %v596 = vadd.f32 0.0, %v595
  %v597 = vpop.f32.mrf.mxu0
  %v598 = vadd.f32 0.0, %v597
  %599 = vdwg.mxu0
  %600 = vmatpush.bf16.msra.mxu0 0
  %601 = vmatpush.bf16.msra.mxu0 0
  %602 = vmatpush.bf16.msra.mxu0 0
  %603 = vmatpush.bf16.msra.mxu0 0
  %604 = vmatpush.bf16.msra.mxu0 0
  %605 = vmatpush.bf16.msra.mxu0 0
  %606 = vmatpush.bf16.msra.mxu0 %v529
  %607 = vmatpush.bf16.msra.mxu0 %v517
  %608 = vmatmul.bf16.gmra.mxu0 %v322
  %v609 = vpop.f32.mrf.mxu0
  %v610 = vadd.f32 0.0, %v609
  %v611 = vpop.f32.mrf.mxu0
  %v612 = vadd.f32 0.0, %v611
  %613 = vmatmul.bf16.gmra.mxu0 %v325
  %v614 = vpop.f32.mrf.mxu0
  %v615 = vadd.f32 0.0, %v614
  %v616 = vpop.f32.mrf.mxu0
  %v617 = vadd.f32 0.0, %v616
  %618 = vmatmul.bf16.gmra.mxu0 %v328
  %v619 = vpop.f32.mrf.mxu0
  %v620 = vadd.f32 0.0, %v619
  %v621 = vpop.f32.mrf.mxu0
  %v622 = vadd.f32 0.0, %v621
  %623 = vmatmul.bf16.gmra.mxu0 %v331
  %v624 = vpop.f32.mrf.mxu0
  %v625 = vadd.f32 0.0, %v624
  %v626 = vpop.f32.mrf.mxu0
  %v627 = vadd.f32 0.0, %v626
  %628 = vmatmul.bf16.gmra.mxu0 %v334
  %v629 = vpop.f32.mrf.mxu0
  %v630 = vadd.f32 0.0, %v629
  %v631 = vpop.f32.mrf.mxu0
  %v632 = vadd.f32 0.0, %v631
  %633 = vmatmul.bf16.gmra.mxu0 %v337
  %v634 = vpop.f32.mrf.mxu0
  %v635 = vadd.f32 0.0, %v634
  %v636 = vpop.f32.mrf.mxu0
  %v637 = vadd.f32 0.0, %v636
  %638 = vmatmul.bf16.gmra.mxu0 %v340
  %v639 = vpop.f32.mrf.mxu0
  %v640 = vadd.f32 0.0, %v639
  %v641 = vpop.f32.mrf.mxu0
  %v642 = vadd.f32 0.0, %v641
  %643 = vmatmul.bf16.gmra.mxu0 %v343
  %v644 = vpop.f32.mrf.mxu0
  %v645 = vadd.f32 0.0, %v644
  %v646 = vpop.f32.mrf.mxu0
  %v647 = vadd.f32 0.0, %v646
  %648 = vmatmul.bf16.gmra.mxu0 %v346
  %v649 = vpop.f32.mrf.mxu0
  %v650 = vadd.f32 0.0, %v649
  %v651 = vpop.f32.mrf.mxu0
  %v652 = vadd.f32 0.0, %v651
  %653 = vmatmul.bf16.gmra.mxu0 %v349
  %v654 = vpop.f32.mrf.mxu0
  %v655 = vadd.f32 0.0, %v654
  %v656 = vpop.f32.mrf.mxu0
  %v657 = vadd.f32 0.0, %v656
  %658 = vmatmul.bf16.gmra.mxu0 %v352
  %v659 = vpop.f32.mrf.mxu0
  %v660 = vadd.f32 0.0, %v659
  %v661 = vpop.f32.mrf.mxu0
  %v662 = vadd.f32 0.0, %v661
  %663 = vmatmul.bf16.gmra.mxu0 %v523
  %v664 = vpop.f32.mrf.mxu0
  %v665 = vadd.f32 0.0, %v664
  %v666 = vpop.f32.mrf.mxu0
  %v667 = vadd.f32 0.0, %v666
  %668 = vdwg.mxu0
  %v669 = vadd.f32 %v370, %v541
  %v670 = vadd.f32 %v439, %v610
  %v671 = vadd.f32 %v372, %v543
  %v672 = vadd.f32 %v441, %v612
  %v673 = vadd.f32 %v375, %v546
  %v674 = vadd.f32 %v444, %v615
  %v675 = vadd.f32 %v377, %v548
  %v676 = vadd.f32 %v446, %v617
  %v677 = vadd.f32 %v380, %v551
  %v678 = vadd.f32 %v449, %v620
  %v679 = vadd.f32 %v382, %v553
  %v680 = vadd.f32 %v451, %v622
  %v681 = vadd.f32 %v385, %v556
  %v682 = vadd.f32 %v454, %v625
  %v683 = vadd.f32 %v387, %v558
  %v684 = vadd.f32 %v456, %v627
  %v685 = vadd.f32 %v390, %v561
  %v686 = vadd.f32 %v459, %v630
  %v687 = vadd.f32 %v392, %v563
  %v688 = vadd.f32 %v461, %v632
  %v689 = vadd.f32 %v395, %v566
  %v690 = vadd.f32 %v464, %v635
  %v691 = vadd.f32 %v397, %v568
  %v692 = vadd.f32 %v466, %v637
  %v693 = vadd.f32 %v400, %v571
  %v694 = vadd.f32 %v469, %v640
  %v695 = vadd.f32 %v402, %v573
  %v696 = vadd.f32 %v471, %v642
  %v697 = vadd.f32 %v405, %v576
  %v698 = vadd.f32 %v474, %v645
  %v699 = vadd.f32 %v407, %v578
  %v700 = vadd.f32 %v476, %v647
  %v701 = vadd.f32 %v410, %v581
  %v702 = vadd.f32 %v479, %v650
  %v703 = vadd.f32 %v412, %v583
  %v704 = vadd.f32 %v481, %v652
  %v705 = vadd.f32 %v415, %v586
  %v706 = vadd.f32 %v484, %v655
  %v707 = vadd.f32 %v417, %v588
  %v708 = vadd.f32 %v486, %v657
  %v709 = vadd.f32 %v420, %v591
  %v710 = vadd.f32 %v489, %v660
  %v711 = vadd.f32 %v422, %v593
  %v712 = vadd.f32 %v491, %v662
  %v713 = vadd.f32 %v425, %v596
  %v714 = vadd.f32 %v494, %v665
  %v715 = vadd.f32 %v427, %v598
  %v716 = vadd.f32 %v496, %v667
  %v717 = vpack.c.bf16 %v65, %v64
  %s718 = scalar_lea.vmem %s1, 96
  %v719 = vld [vmem:[%s718] sm:$0xff]
  %v720 = vld [vmem:[%s718 + $0x8] sm:$0xff]
  %v721 = vld [vmem:[%s718 + $0x10] sm:$0xff]
  %v722 = vld [vmem:[%s718 + $0x18] sm:$0x33]
  %v727 = vunpack.c.l.b16 %v719
  %v728 = vunpack.c.h.b16 %v719
  %v729 = vunpack.c.l.b16 %v720
  %v730 = vunpack.c.h.b16 %v720
  %v731 = vunpack.c.l.b16 %v721
  %v732 = vunpack.c.h.b16 %v721
  %v733 = vunpack.c.l.b16 %v722
  %v734 = vunpack.c.h.b16 %v722
  %v735 = vpack.c.b16 %v729, %v727
  %v736 = vpack.c.b16 %v730, %v728
  %v737 = vpack.c.b16 %v733, %v731
  %v738 = vpack.c.b16 %v734, %v732
  %v742 = vsel %vm118, %v717, 0
  %v745 = vsel %vm155, %v737, 0
  %v748 = vsel %vm155, %v738, 0
  %750 = vmatpush.bf16.msra.mxu0 0
  %751 = vmatpush.bf16.msra.mxu0 0
  %752 = vmatpush.bf16.msra.mxu0 0
  %753 = vmatpush.bf16.msra.mxu0 0
  %754 = vmatpush.bf16.msra.mxu0 0
  %755 = vmatpush.bf16.msra.mxu0 0
  %756 = vmatpush.bf16.msra.mxu0 %v745
  %757 = vmatpush.bf16.msra.mxu0 %v735
  %758 = vmatmul.bf16.gmra.mxu0 %v123
  %v759 = vpop.f32.mrf.mxu0
  %v760 = vadd.f32 0.0, %v759
  %v761 = vpop.f32.mrf.mxu0
  %v762 = vadd.f32 0.0, %v761
  %763 = vmatmul.bf16.gmra.mxu0 %v126
  %v764 = vpop.f32.mrf.mxu0
  %v765 = vadd.f32 0.0, %v764
  %v766 = vpop.f32.mrf.mxu0
  %v767 = vadd.f32 0.0, %v766
  %768 = vmatmul.bf16.gmra.mxu0 %v129
  %v769 = vpop.f32.mrf.mxu0
  %v770 = vadd.f32 0.0, %v769
  %v771 = vpop.f32.mrf.mxu0
  %v772 = vadd.f32 0.0, %v771
  %773 = vmatmul.bf16.gmra.mxu0 %v132
  %v774 = vpop.f32.mrf.mxu0
  %v775 = vadd.f32 0.0, %v774
  %v776 = vpop.f32.mrf.mxu0
  %v777 = vadd.f32 0.0, %v776
  %778 = vmatmul.bf16.gmra.mxu0 %v135
  %v779 = vpop.f32.mrf.mxu0
  %v780 = vadd.f32 0.0, %v779
  %v781 = vpop.f32.mrf.mxu0
  %v782 = vadd.f32 0.0, %v781
  %783 = vmatmul.bf16.gmra.mxu0 %v138
  %v784 = vpop.f32.mrf.mxu0
  %v785 = vadd.f32 0.0, %v784
  %v786 = vpop.f32.mrf.mxu0
  %v787 = vadd.f32 0.0, %v786
  %788 = vmatmul.bf16.gmra.mxu0 %v141
  %v789 = vpop.f32.mrf.mxu0
  %v790 = vadd.f32 0.0, %v789
  %v791 = vpop.f32.mrf.mxu0
  %v792 = vadd.f32 0.0, %v791
  %793 = vmatmul.bf16.gmra.mxu0 %v144
  %v794 = vpop.f32.mrf.mxu0
  %v795 = vadd.f32 0.0, %v794
  %v796 = vpop.f32.mrf.mxu0
  %v797 = vadd.f32 0.0, %v796
  %798 = vmatmul.bf16.gmra.mxu0 %v147
  %v799 = vpop.f32.mrf.mxu0
  %v800 = vadd.f32 0.0, %v799
  %v801 = vpop.f32.mrf.mxu0
  %v802 = vadd.f32 0.0, %v801
  %803 = vmatmul.bf16.gmra.mxu0 %v150
  %v804 = vpop.f32.mrf.mxu0
  %v805 = vadd.f32 0.0, %v804
  %v806 = vpop.f32.mrf.mxu0
  %v807 = vadd.f32 0.0, %v806
  %808 = vmatmul.bf16.gmra.mxu0 %v153
  %v809 = vpop.f32.mrf.mxu0
  %v810 = vadd.f32 0.0, %v809
  %v811 = vpop.f32.mrf.mxu0
  %v812 = vadd.f32 0.0, %v811
  %813 = vmatmul.bf16.gmra.mxu0 %v742
  %v814 = vpop.f32.mrf.mxu0
  %v815 = vadd.f32 0.0, %v814
  %v816 = vpop.f32.mrf.mxu0
  %v817 = vadd.f32 0.0, %v816
  %818 = vdwg.mxu0
  %819 = vmatpush.bf16.msra.mxu0 0
  %820 = vmatpush.bf16.msra.mxu0 0
  %821 = vmatpush.bf16.msra.mxu0 0
  %822 = vmatpush.bf16.msra.mxu0 0
  %823 = vmatpush.bf16.msra.mxu0 0
  %824 = vmatpush.bf16.msra.mxu0 0
  %825 = vmatpush.bf16.msra.mxu0 %v748
  %826 = vmatpush.bf16.msra.mxu0 %v736
  %827 = vmatmul.bf16.gmra.mxu0 %v123
  %v828 = vpop.f32.mrf.mxu0
  %v829 = vadd.f32 0.0, %v828
  %v830 = vpop.f32.mrf.mxu0
  %v831 = vadd.f32 0.0, %v830
  %832 = vmatmul.bf16.gmra.mxu0 %v126
  %v833 = vpop.f32.mrf.mxu0
  %v834 = vadd.f32 0.0, %v833
  %v835 = vpop.f32.mrf.mxu0
  %v836 = vadd.f32 0.0, %v835
  %837 = vmatmul.bf16.gmra.mxu0 %v129
  %v838 = vpop.f32.mrf.mxu0
  %v839 = vadd.f32 0.0, %v838
  %v840 = vpop.f32.mrf.mxu0
  %v841 = vadd.f32 0.0, %v840
  %842 = vmatmul.bf16.gmra.mxu0 %v132
  %v843 = vpop.f32.mrf.mxu0
  %v844 = vadd.f32 0.0, %v843
  %v845 = vpop.f32.mrf.mxu0
  %v846 = vadd.f32 0.0, %v845
  %847 = vmatmul.bf16.gmra.mxu0 %v135
  %v848 = vpop.f32.mrf.mxu0
  %v849 = vadd.f32 0.0, %v848
  %v850 = vpop.f32.mrf.mxu0
  %v851 = vadd.f32 0.0, %v850
  %852 = vmatmul.bf16.gmra.mxu0 %v138
  %v853 = vpop.f32.mrf.mxu0
  %v854 = vadd.f32 0.0, %v853
  %v855 = vpop.f32.mrf.mxu0
  %v856 = vadd.f32 0.0, %v855
  %857 = vmatmul.bf16.gmra.mxu0 %v141
  %v858 = vpop.f32.mrf.mxu0
  %v859 = vadd.f32 0.0, %v858
  %v860 = vpop.f32.mrf.mxu0
  %v861 = vadd.f32 0.0, %v860
  %862 = vmatmul.bf16.gmra.mxu0 %v144
  %v863 = vpop.f32.mrf.mxu0
  %v864 = vadd.f32 0.0, %v863
  %v865 = vpop.f32.mrf.mxu0
  %v866 = vadd.f32 0.0, %v865
  %867 = vmatmul.bf16.gmra.mxu0 %v147
  %v868 = vpop.f32.mrf.mxu0
  %v869 = vadd.f32 0.0, %v868
  %v870 = vpop.f32.mrf.mxu0
  %v871 = vadd.f32 0.0, %v870
  %872 = vmatmul.bf16.gmra.mxu0 %v150
  %v873 = vpop.f32.mrf.mxu0
  %v874 = vadd.f32 0.0, %v873
  %v875 = vpop.f32.mrf.mxu0
  %v876 = vadd.f32 0.0, %v875
  %877 = vmatmul.bf16.gmra.mxu0 %v153
  %v878 = vpop.f32.mrf.mxu0
  %v879 = vadd.f32 0.0, %v878
  %v880 = vpop.f32.mrf.mxu0
  %v881 = vadd.f32 0.0, %v880
  %882 = vmatmul.bf16.gmra.mxu0 %v742
  %v883 = vpop.f32.mrf.mxu0
  %v884 = vadd.f32 0.0, %v883
  %v885 = vpop.f32.mrf.mxu0
  %v886 = vadd.f32 0.0, %v885
  %887 = vdwg.mxu0
  %v888 = vadd.f32 %v669, %v760
  %v889 = vadd.f32 %v670, %v829
  %v890 = vadd.f32 %v671, %v762
  %v891 = vadd.f32 %v672, %v831
  %v892 = vadd.f32 %v673, %v765
  %v893 = vadd.f32 %v674, %v834
  %v894 = vadd.f32 %v675, %v767
  %v895 = vadd.f32 %v676, %v836
  %v896 = vadd.f32 %v677, %v770
  %v897 = vadd.f32 %v678, %v839
  %v898 = vadd.f32 %v679, %v772
  %v899 = vadd.f32 %v680, %v841
  %v900 = vadd.f32 %v681, %v775
  %v901 = vadd.f32 %v682, %v844
  %v902 = vadd.f32 %v683, %v777
  %v903 = vadd.f32 %v684, %v846
  %v904 = vadd.f32 %v685, %v780
  %v905 = vadd.f32 %v686, %v849
  %v906 = vadd.f32 %v687, %v782
  %v907 = vadd.f32 %v688, %v851
  %v908 = vadd.f32 %v689, %v785
  %v909 = vadd.f32 %v690, %v854
  %v910 = vadd.f32 %v691, %v787
  %v911 = vadd.f32 %v692, %v856
  %v912 = vadd.f32 %v693, %v790
  %v913 = vadd.f32 %v694, %v859
  %v914 = vadd.f32 %v695, %v792
  %v915 = vadd.f32 %v696, %v861
  %v916 = vadd.f32 %v697, %v795
  %v917 = vadd.f32 %v698, %v864
  %v918 = vadd.f32 %v699, %v797
  %v919 = vadd.f32 %v700, %v866
  %v920 = vadd.f32 %v701, %v800
  %v921 = vadd.f32 %v702, %v869
  %v922 = vadd.f32 %v703, %v802
  %v923 = vadd.f32 %v704, %v871
  %v924 = vadd.f32 %v705, %v805
  %v925 = vadd.f32 %v706, %v874
  %v926 = vadd.f32 %v707, %v807
  %v927 = vadd.f32 %v708, %v876
  %v928 = vadd.f32 %v709, %v810
  %v929 = vadd.f32 %v710, %v879
  %v930 = vadd.f32 %v711, %v812
  %v931 = vadd.f32 %v712, %v881
  %v932 = vadd.f32 %v713, %v815
  %v933 = vadd.f32 %v714, %v884
  %v934 = vadd.f32 %v715, %v817
  %v935 = vadd.f32 %v716, %v886
  %v936 = vpack.c.bf16 %v66, %v65
  %s937 = scalar_lea.vmem %s1, 128
  %v938 = vld [vmem:[%s937] sm:$0xff]
  %v939 = vld [vmem:[%s937 + $0x8] sm:$0xff]
  %v940 = vld [vmem:[%s937 + $0x10] sm:$0xff]
  %v941 = vld [vmem:[%s937 + $0x18] sm:$0x33]
  %v946 = vunpack.c.l.b16 %v938
  %v947 = vunpack.c.h.b16 %v938
  %v948 = vunpack.c.l.b16 %v939
  %v949 = vunpack.c.h.b16 %v939
  %v950 = vunpack.c.l.b16 %v940
  %v951 = vunpack.c.h.b16 %v940
  %v952 = vunpack.c.l.b16 %v941
  %v953 = vunpack.c.h.b16 %v941
  %v954 = vpack.c.b16 %v948, %v946
  %v955 = vpack.c.b16 %v949, %v947
  %v956 = vpack.c.b16 %v952, %v950
  %v957 = vpack.c.b16 %v953, %v951
  %v961 = vsel %vm118, %v936, 0
  %v964 = vsel %vm155, %v956, 0
  %v967 = vsel %vm155, %v957, 0
  %969 = vmatpush.bf16.msra.mxu0 0
  %970 = vmatpush.bf16.msra.mxu0 0
  %971 = vmatpush.bf16.msra.mxu0 0
  %972 = vmatpush.bf16.msra.mxu0 0
  %973 = vmatpush.bf16.msra.mxu0 0
  %974 = vmatpush.bf16.msra.mxu0 0
  %975 = vmatpush.bf16.msra.mxu0 %v964
  %976 = vmatpush.bf16.msra.mxu0 %v954
  %977 = vmatmul.bf16.gmra.mxu0 %v325
  %v978 = vpop.f32.mrf.mxu0
  %v979 = vadd.f32 0.0, %v978
  %v980 = vpop.f32.mrf.mxu0
  %v981 = vadd.f32 0.0, %v980
  %982 = vmatmul.bf16.gmra.mxu0 %v328
  %v983 = vpop.f32.mrf.mxu0
  %v984 = vadd.f32 0.0, %v983
  %v985 = vpop.f32.mrf.mxu0
  %v986 = vadd.f32 0.0, %v985
  %987 = vmatmul.bf16.gmra.mxu0 %v331
  %v988 = vpop.f32.mrf.mxu0
  %v989 = vadd.f32 0.0, %v988
  %v990 = vpop.f32.mrf.mxu0
  %v991 = vadd.f32 0.0, %v990
  %992 = vmatmul.bf16.gmra.mxu0 %v334
  %v993 = vpop.f32.mrf.mxu0
  %v994 = vadd.f32 0.0, %v993
  %v995 = vpop.f32.mrf.mxu0
  %v996 = vadd.f32 0.0, %v995
  %997 = vmatmul.bf16.gmra.mxu0 %v337
  %v998 = vpop.f32.mrf.mxu0
  %v999 = vadd.f32 0.0, %v998
  %v1000 = vpop.f32.mrf.mxu0
  %v1001 = vadd.f32 0.0, %v1000
  %1002 = vmatmul.bf16.gmra.mxu0 %v340
  %v1003 = vpop.f32.mrf.mxu0
  %v1004 = vadd.f32 0.0, %v1003
  %v1005 = vpop.f32.mrf.mxu0
  %v1006 = vadd.f32 0.0, %v1005
  %1007 = vmatmul.bf16.gmra.mxu0 %v343
  %v1008 = vpop.f32.mrf.mxu0
  %v1009 = vadd.f32 0.0, %v1008
  %v1010 = vpop.f32.mrf.mxu0
  %v1011 = vadd.f32 0.0, %v1010
  %1012 = vmatmul.bf16.gmra.mxu0 %v346
  %v1013 = vpop.f32.mrf.mxu0
  %v1014 = vadd.f32 0.0, %v1013
  %v1015 = vpop.f32.mrf.mxu0
  %v1016 = vadd.f32 0.0, %v1015
  %1017 = vmatmul.bf16.gmra.mxu0 %v349
  %v1018 = vpop.f32.mrf.mxu0
  %v1019 = vadd.f32 0.0, %v1018
  %v1020 = vpop.f32.mrf.mxu0
  %v1021 = vadd.f32 0.0, %v1020
  %1022 = vmatmul.bf16.gmra.mxu0 %v352
  %v1023 = vpop.f32.mrf.mxu0
  %v1024 = vadd.f32 0.0, %v1023
  %v1025 = vpop.f32.mrf.mxu0
  %v1026 = vadd.f32 0.0, %v1025
  %1027 = vmatmul.bf16.gmra.mxu0 %v523
  %v1028 = vpop.f32.mrf.mxu0
  %v1029 = vadd.f32 0.0, %v1028
  %v1030 = vpop.f32.mrf.mxu0
  %v1031 = vadd.f32 0.0, %v1030
  %1032 = vmatmul.bf16.gmra.mxu0 %v961
  %v1033 = vpop.f32.mrf.mxu0
  %v1034 = vadd.f32 0.0, %v1033
  %v1035 = vpop.f32.mrf.mxu0
  %v1036 = vadd.f32 0.0, %v1035
  %1037 = vdwg.mxu0
  %1038 = vmatpush.bf16.msra.mxu0 0
  %1039 = vmatpush.bf16.msra.mxu0 0
  %1040 = vmatpush.bf16.msra.mxu0 0
  %1041 = vmatpush.bf16.msra.mxu0 0
  %1042 = vmatpush.bf16.msra.mxu0 0
  %1043 = vmatpush.bf16.msra.mxu0 0
  %1044 = vmatpush.bf16.msra.mxu0 %v967
  %1045 = vmatpush.bf16.msra.mxu0 %v955
  %1046 = vmatmul.bf16.gmra.mxu0 %v325
  %v1047 = vpop.f32.mrf.mxu0
  %v1048 = vadd.f32 0.0, %v1047
  %v1049 = vpop.f32.mrf.mxu0
  %v1050 = vadd.f32 0.0, %v1049
  %1051 = vmatmul.bf16.gmra.mxu0 %v328
  %v1052 = vpop.f32.mrf.mxu0
  %v1053 = vadd.f32 0.0, %v1052
  %v1054 = vpop.f32.mrf.mxu0
  %v1055 = vadd.f32 0.0, %v1054
  %1056 = vmatmul.bf16.gmra.mxu0 %v331
  %v1057 = vpop.f32.mrf.mxu0
  %v1058 = vadd.f32 0.0, %v1057
  %v1059 = vpop.f32.mrf.mxu0
  %v1060 = vadd.f32 0.0, %v1059
  %1061 = vmatmul.bf16.gmra.mxu0 %v334
  %v1062 = vpop.f32.mrf.mxu0
  %v1063 = vadd.f32 0.0, %v1062
  %v1064 = vpop.f32.mrf.mxu0
  %v1065 = vadd.f32 0.0, %v1064
  %1066 = vmatmul.bf16.gmra.mxu0 %v337
  %v1067 = vpop.f32.mrf.mxu0
  %v1068 = vadd.f32 0.0, %v1067
  %v1069 = vpop.f32.mrf.mxu0
  %v1070 = vadd.f32 0.0, %v1069
  %1071 = vmatmul.bf16.gmra.mxu0 %v340
  %v1072 = vpop.f32.mrf.mxu0
  %v1073 = vadd.f32 0.0, %v1072
  %v1074 = vpop.f32.mrf.mxu0
  %v1075 = vadd.f32 0.0, %v1074
  %1076 = vmatmul.bf16.gmra.mxu0 %v343
  %v1077 = vpop.f32.mrf.mxu0
  %v1078 = vadd.f32 0.0, %v1077
  %v1079 = vpop.f32.mrf.mxu0
  %v1080 = vadd.f32 0.0, %v1079
  %1081 = vmatmul.bf16.gmra.mxu0 %v346
  %v1082 = vpop.f32.mrf.mxu0
  %v1083 = vadd.f32 0.0, %v1082
  %v1084 = vpop.f32.mrf.mxu0
  %v1085 = vadd.f32 0.0, %v1084
  %1086 = vmatmul.bf16.gmra.mxu0 %v349
  %v1087 = vpop.f32.mrf.mxu0
  %v1088 = vadd.f32 0.0, %v1087
  %v1089 = vpop.f32.mrf.mxu0
  %v1090 = vadd.f32 0.0, %v1089
  %1091 = vmatmul.bf16.gmra.mxu0 %v352
  %v1092 = vpop.f32.mrf.mxu0
  %v1093 = vadd.f32 0.0, %v1092
  %v1094 = vpop.f32.mrf.mxu0
  %v1095 = vadd.f32 0.0, %v1094
  %1096 = vmatmul.bf16.gmra.mxu0 %v523
  %v1097 = vpop.f32.mrf.mxu0
  %v1098 = vadd.f32 0.0, %v1097
  %v1099 = vpop.f32.mrf.mxu0
  %v1100 = vadd.f32 0.0, %v1099
  %1101 = vmatmul.bf16.gmra.mxu0 %v961
  %v1102 = vpop.f32.mrf.mxu0
  %v1103 = vadd.f32 0.0, %v1102
  %v1104 = vpop.f32.mrf.mxu0
  %v1105 = vadd.f32 0.0, %v1104
  %1106 = vdwg.mxu0
  %v1107 = vadd.f32 %v888, %v979
  %v1108 = vadd.f32 %v889, %v1048
  %v1109 = vadd.f32 %v890, %v981
  %v1110 = vadd.f32 %v891, %v1050
  %v1111 = vadd.f32 %v892, %v984
  %v1112 = vadd.f32 %v893, %v1053
  %v1113 = vadd.f32 %v894, %v986
  %v1114 = vadd.f32 %v895, %v1055
  %v1115 = vadd.f32 %v896, %v989
  %v1116 = vadd.f32 %v897, %v1058
  %v1117 = vadd.f32 %v898, %v991
  %v1118 = vadd.f32 %v899, %v1060
  %v1119 = vadd.f32 %v900, %v994
  %v1120 = vadd.f32 %v901, %v1063
  %v1121 = vadd.f32 %v902, %v996
  %v1122 = vadd.f32 %v903, %v1065
  %v1123 = vadd.f32 %v904, %v999
  %v1124 = vadd.f32 %v905, %v1068
  %v1125 = vadd.f32 %v906, %v1001
  %v1126 = vadd.f32 %v907, %v1070
  %v1127 = vadd.f32 %v908, %v1004
  %v1128 = vadd.f32 %v909, %v1073
  %v1129 = vadd.f32 %v910, %v1006
  %v1130 = vadd.f32 %v911, %v1075
  %v1131 = vadd.f32 %v912, %v1009
  %v1132 = vadd.f32 %v913, %v1078
  %v1133 = vadd.f32 %v914, %v1011
  %v1134 = vadd.f32 %v915, %v1080
  %v1135 = vadd.f32 %v916, %v1014
  %v1136 = vadd.f32 %v917, %v1083
  %v1137 = vadd.f32 %v918, %v1016
  %v1138 = vadd.f32 %v919, %v1085
  %v1139 = vadd.f32 %v920, %v1019
  %v1140 = vadd.f32 %v921, %v1088
  %v1141 = vadd.f32 %v922, %v1021
  %v1142 = vadd.f32 %v923, %v1090
  %v1143 = vadd.f32 %v924, %v1024
  %v1144 = vadd.f32 %v925, %v1093
  %v1145 = vadd.f32 %v926, %v1026
  %v1146 = vadd.f32 %v927, %v1095
  %v1147 = vadd.f32 %v928, %v1029
  %v1148 = vadd.f32 %v929, %v1098
  %v1149 = vadd.f32 %v930, %v1031
  %v1150 = vadd.f32 %v931, %v1100
  %v1151 = vadd.f32 %v932, %v1034
  %v1152 = vadd.f32 %v933, %v1103
  %v1153 = vadd.f32 %v934, %v1036
  %v1154 = vadd.f32 %v935, %v1105
  %v1155 = vld [vmem:[%s2] sm:$0x3]
  %v1157 = vperm.slane %v1155, 0
  %v1158 = vperm.slane %v1155, 1
  %v1161 = vadd.f32 %v1107, %v1157
  %v1162 = vadd.f32 %v1108, %v1158
  %v1163 = vadd.f32 %v1109, %v1157
  %v1164 = vadd.f32 %v1110, %v1158
  %v1165 = vadd.f32 %v1111, %v1157
  %v1166 = vadd.f32 %v1112, %v1158
  %v1167 = vadd.f32 %v1113, %v1157
  %v1168 = vadd.f32 %v1114, %v1158
  %v1169 = vadd.f32 %v1115, %v1157
  %v1170 = vadd.f32 %v1116, %v1158
  %v1171 = vadd.f32 %v1117, %v1157
  %v1172 = vadd.f32 %v1118, %v1158
  %v1173 = vadd.f32 %v1119, %v1157
  %v1174 = vadd.f32 %v1120, %v1158
  %v1175 = vadd.f32 %v1121, %v1157
  %v1176 = vadd.f32 %v1122, %v1158
  %v1177 = vadd.f32 %v1123, %v1157
  %v1178 = vadd.f32 %v1124, %v1158
  %v1179 = vadd.f32 %v1125, %v1157
  %v1180 = vadd.f32 %v1126, %v1158
  %v1181 = vadd.f32 %v1127, %v1157
  %v1182 = vadd.f32 %v1128, %v1158
  %v1183 = vadd.f32 %v1129, %v1157
  %v1184 = vadd.f32 %v1130, %v1158
  %v1185 = vadd.f32 %v1131, %v1157
  %v1186 = vadd.f32 %v1132, %v1158
  %v1187 = vadd.f32 %v1133, %v1157
  %v1188 = vadd.f32 %v1134, %v1158
  %v1189 = vadd.f32 %v1135, %v1157
  %v1190 = vadd.f32 %v1136, %v1158
  %v1191 = vadd.f32 %v1137, %v1157
  %v1192 = vadd.f32 %v1138, %v1158
  %v1193 = vadd.f32 %v1139, %v1157
  %v1194 = vadd.f32 %v1140, %v1158
  %v1195 = vadd.f32 %v1141, %v1157
  %v1196 = vadd.f32 %v1142, %v1158
  %v1197 = vadd.f32 %v1143, %v1157
  %v1198 = vadd.f32 %v1144, %v1158
  %v1199 = vadd.f32 %v1145, %v1157
  %v1200 = vadd.f32 %v1146, %v1158
  %v1201 = vadd.f32 %v1147, %v1157
  %v1202 = vadd.f32 %v1148, %v1158
  %v1203 = vadd.f32 %v1149, %v1157
  %v1204 = vadd.f32 %v1150, %v1158
  %v1205 = vadd.f32 %v1151, %v1157
  %v1206 = vadd.f32 %v1152, %v1158
  %v1207 = vadd.f32 %v1153, %v1157
  %v1208 = vadd.f32 %v1154, %v1158
  %v1209 = vmax.f32 %v1161, 0.0
  %v1210 = vmax.f32 %v1162, 0.0
  %v1211 = vmax.f32 %v1163, 0.0
  %v1212 = vmax.f32 %v1164, 0.0
  %v1213 = vmax.f32 %v1165, 0.0
  %v1214 = vmax.f32 %v1166, 0.0
  %v1215 = vmax.f32 %v1167, 0.0
  %v1216 = vmax.f32 %v1168, 0.0
  %v1217 = vmax.f32 %v1169, 0.0
  %v1218 = vmax.f32 %v1170, 0.0
  %v1219 = vmax.f32 %v1171, 0.0
  %v1220 = vmax.f32 %v1172, 0.0
  %v1221 = vmax.f32 %v1173, 0.0
  %v1222 = vmax.f32 %v1174, 0.0
  %v1223 = vmax.f32 %v1175, 0.0
  %v1224 = vmax.f32 %v1176, 0.0
  %v1225 = vmax.f32 %v1177, 0.0
  %v1226 = vmax.f32 %v1178, 0.0
  %v1227 = vmax.f32 %v1179, 0.0
  %v1228 = vmax.f32 %v1180, 0.0
  %v1229 = vmax.f32 %v1181, 0.0
  %v1230 = vmax.f32 %v1182, 0.0
  %v1231 = vmax.f32 %v1183, 0.0
  %v1232 = vmax.f32 %v1184, 0.0
  %v1233 = vmax.f32 %v1185, 0.0
  %v1234 = vmax.f32 %v1186, 0.0
  %v1235 = vmax.f32 %v1187, 0.0
  %v1236 = vmax.f32 %v1188, 0.0
  %v1237 = vmax.f32 %v1189, 0.0
  %v1238 = vmax.f32 %v1190, 0.0
  %v1239 = vmax.f32 %v1191, 0.0
  %v1240 = vmax.f32 %v1192, 0.0
  %v1241 = vmax.f32 %v1193, 0.0
  %v1242 = vmax.f32 %v1194, 0.0
  %v1243 = vmax.f32 %v1195, 0.0
  %v1244 = vmax.f32 %v1196, 0.0
  %v1245 = vmax.f32 %v1197, 0.0
  %v1246 = vmax.f32 %v1198, 0.0
  %v1247 = vmax.f32 %v1199, 0.0
  %v1248 = vmax.f32 %v1200, 0.0
  %v1249 = vmax.f32 %v1201, 0.0
  %v1250 = vmax.f32 %v1202, 0.0
  %v1251 = vmax.f32 %v1203, 0.0
  %v1252 = vmax.f32 %v1204, 0.0
  %v1253 = vmax.f32 %v1205, 0.0
  %v1254 = vmax.f32 %v1206, 0.0
  %v1255 = vmax.f32 %v1207, 0.0
  %v1256 = vmax.f32 %v1208, 0.0
  %1305 = vrot.lane.b32.xlu0 %v1209, 56
  %v1306 = vpop.permute.xlu0 %1305
  %1307 = vrot.lane.b32.xlu0 %v1210, 56
  %v1308 = vpop.permute.xlu0 %1307
  %1309 = vrot.lane.b32.xlu0 %v1211, 56
  %v1310 = vpop.permute.xlu0 %1309
  %1311 = vrot.lane.b32.xlu0 %v1212, 56
  %v1312 = vpop.permute.xlu0 %1311
  %1313 = vrot.lane.b32.xlu0 %v1213, 56
  %v1314 = vpop.permute.xlu0 %1313
  %1315 = vrot.lane.b32.xlu0 %v1214, 56
  %v1316 = vpop.permute.xlu0 %1315
  %1317 = vrot.lane.b32.xlu0 %v1215, 56
  %v1318 = vpop.permute.xlu0 %1317
  %1319 = vrot.lane.b32.xlu0 %v1216, 56
  %v1320 = vpop.permute.xlu0 %1319
  %1321 = vrot.lane.b32.xlu0 %v1217, 56
  %v1322 = vpop.permute.xlu0 %1321
  %1323 = vrot.lane.b32.xlu0 %v1218, 56
  %v1324 = vpop.permute.xlu0 %1323
  %1325 = vrot.lane.b32.xlu0 %v1219, 56
  %v1326 = vpop.permute.xlu0 %1325
  %1327 = vrot.lane.b32.xlu0 %v1220, 56
  %v1328 = vpop.permute.xlu0 %1327
  %1329 = vrot.lane.b32.xlu0 %v1221, 56
  %v1330 = vpop.permute.xlu0 %1329
  %1331 = vrot.lane.b32.xlu0 %v1222, 56
  %v1332 = vpop.permute.xlu0 %1331
  %1333 = vrot.lane.b32.xlu0 %v1223, 56
  %v1334 = vpop.permute.xlu0 %1333
  %1335 = vrot.lane.b32.xlu0 %v1224, 56
  %v1336 = vpop.permute.xlu0 %1335
  %1337 = vrot.lane.b32.xlu0 %v1225, 56
  %v1338 = vpop.permute.xlu0 %1337
  %1339 = vrot.lane.b32.xlu0 %v1226, 56
  %v1340 = vpop.permute.xlu0 %1339
  %1341 = vrot.lane.b32.xlu0 %v1227, 56
  %v1342 = vpop.permute.xlu0 %1341
  %1343 = vrot.lane.b32.xlu0 %v1228, 56
  %v1344 = vpop.permute.xlu0 %1343
  %1345 = vrot.lane.b32.xlu0 %v1229, 56
  %v1346 = vpop.permute.xlu0 %1345
  %1347 = vrot.lane.b32.xlu0 %v1230, 56
  %v1348 = vpop.permute.xlu0 %1347
  %1349 = vrot.lane.b32.xlu0 %v1231, 56
  %v1350 = vpop.permute.xlu0 %1349
  %1351 = vrot.lane.b32.xlu0 %v1232, 56
  %v1352 = vpop.permute.xlu0 %1351
  %1353 = vrot.lane.b32.xlu0 %v1233, 56
  %v1354 = vpop.permute.xlu0 %1353
  %1355 = vrot.lane.b32.xlu0 %v1234, 56
  %v1356 = vpop.permute.xlu0 %1355
  %1357 = vrot.lane.b32.xlu0 %v1235, 56
  %v1358 = vpop.permute.xlu0 %1357
  %1359 = vrot.lane.b32.xlu0 %v1236, 56
  %v1360 = vpop.permute.xlu0 %1359
  %1361 = vrot.lane.b32.xlu0 %v1237, 56
  %v1362 = vpop.permute.xlu0 %1361
  %1363 = vrot.lane.b32.xlu0 %v1238, 56
  %v1364 = vpop.permute.xlu0 %1363
  %1365 = vrot.lane.b32.xlu0 %v1239, 56
  %v1366 = vpop.permute.xlu0 %1365
  %1367 = vrot.lane.b32.xlu0 %v1240, 56
  %v1368 = vpop.permute.xlu0 %1367
  %1369 = vrot.lane.b32.xlu0 %v1241, 56
  %v1370 = vpop.permute.xlu0 %1369
  %1371 = vrot.lane.b32.xlu0 %v1242, 56
  %v1372 = vpop.permute.xlu0 %1371
  %1373 = vrot.lane.b32.xlu0 %v1243, 56
  %v1374 = vpop.permute.xlu0 %1373
  %1375 = vrot.lane.b32.xlu0 %v1244, 56
  %v1376 = vpop.permute.xlu0 %1375
  %1377 = vrot.lane.b32.xlu0 %v1245, 56
  %v1378 = vpop.permute.xlu0 %1377
  %1379 = vrot.lane.b32.xlu0 %v1246, 56
  %v1380 = vpop.permute.xlu0 %1379
  %1381 = vrot.lane.b32.xlu0 %v1247, 56
  %v1382 = vpop.permute.xlu0 %1381
  %1383 = vrot.lane.b32.xlu0 %v1248, 56
  %v1384 = vpop.permute.xlu0 %1383
  %1385 = vrot.lane.b32.xlu0 %v1249, 56
  %v1386 = vpop.permute.xlu0 %1385
  %1387 = vrot.lane.b32.xlu0 %v1250, 56
  %v1388 = vpop.permute.xlu0 %1387
  %1389 = vrot.lane.b32.xlu0 %v1251, 56
  %v1390 = vpop.permute.xlu0 %1389
  %1391 = vrot.lane.b32.xlu0 %v1252, 56
  %v1392 = vpop.permute.xlu0 %1391
  %1393 = vrot.lane.b32.xlu0 %v1253, 56
  %v1394 = vpop.permute.xlu0 %1393
  %1395 = vrot.lane.b32.xlu0 %v1254, 56
  %v1396 = vpop.permute.xlu0 %1395
  %1397 = vrot.lane.b32.xlu0 %v1255, 56
  %v1398 = vpop.permute.xlu0 %1397
  %1399 = vrot.lane.b32.xlu0 %v1256, 56
  %v1400 = vpop.permute.xlu0 %1399
  %vm1401 = vcmask 457728
  %v1402 = vsel %vm1401, %v1306, %v1308
  %v1403 = vsel %vm1401, %v1310, %v1312
  %v1404 = vsel %vm1401, %v1314, %v1316
  %v1405 = vsel %vm1401, %v1318, %v1320
  %v1406 = vsel %vm1401, %v1322, %v1324
  %v1407 = vsel %vm1401, %v1326, %v1328
  %v1408 = vsel %vm1401, %v1330, %v1332
  %v1409 = vsel %vm1401, %v1334, %v1336
  %v1410 = vsel %vm1401, %v1338, %v1340
  %v1411 = vsel %vm1401, %v1342, %v1344
  %v1412 = vsel %vm1401, %v1346, %v1348
  %v1413 = vsel %vm1401, %v1350, %v1352
  %v1414 = vsel %vm1401, %v1354, %v1356
  %v1415 = vsel %vm1401, %v1358, %v1360
  %v1416 = vsel %vm1401, %v1362, %v1364
  %v1417 = vsel %vm1401, %v1366, %v1368
  %v1418 = vsel %vm1401, %v1370, %v1372
  %v1419 = vsel %vm1401, %v1374, %v1376
  %v1420 = vsel %vm1401, %v1378, %v1380
  %v1421 = vsel %vm1401, %v1382, %v1384
  %v1422 = vsel %vm1401, %v1386, %v1388
  %v1423 = vsel %vm1401, %v1390, %v1392
  %v1424 = vsel %vm1401, %v1394, %v1396
  %v1425 = vsel %vm1401, %v1398, %v1400
  %v1450 = vmax.f32 %v1209, %v1402
  %v1451 = vmax.f32 %v1211, %v1403
  %v1452 = vmax.f32 %v1213, %v1404
  %v1453 = vmax.f32 %v1215, %v1405
  %v1454 = vmax.f32 %v1217, %v1406
  %v1455 = vmax.f32 %v1219, %v1407
  %v1456 = vmax.f32 %v1221, %v1408
  %v1457 = vmax.f32 %v1223, %v1409
  %v1458 = vmax.f32 %v1225, %v1410
  %v1459 = vmax.f32 %v1227, %v1411
  %v1460 = vmax.f32 %v1229, %v1412
  %v1461 = vmax.f32 %v1231, %v1413
  %v1462 = vmax.f32 %v1233, %v1414
  %v1463 = vmax.f32 %v1235, %v1415
  %v1464 = vmax.f32 %v1237, %v1416
  %v1465 = vmax.f32 %v1239, %v1417
  %v1466 = vmax.f32 %v1241, %v1418
  %v1467 = vmax.f32 %v1243, %v1419
  %v1468 = vmax.f32 %v1245, %v1420
  %v1469 = vmax.f32 %v1247, %v1421
  %v1470 = vmax.f32 %v1249, %v1422
  %v1471 = vmax.f32 %v1251, %v1423
  %v1472 = vmax.f32 %v1253, %v1424
  %v1473 = vmax.f32 %v1255, %v1425
  %v1474 = vmax.f32 %v1450, %v1451
  %v1475 = vmax.f32 %v1452, %v1453
  %v1476 = vmax.f32 %v1454, %v1455
  %v1477 = vmax.f32 %v1456, %v1457
  %v1478 = vmax.f32 %v1458, %v1459
  %v1479 = vmax.f32 %v1460, %v1461
  %v1480 = vmax.f32 %v1462, %v1463
  %v1481 = vmax.f32 %v1464, %v1465
  %v1482 = vmax.f32 %v1466, %v1467
  %v1483 = vmax.f32 %v1468, %v1469
  %v1484 = vmax.f32 %v1470, %v1471
  %v1485 = vmax.f32 %v1472, %v1473
  %v1486 = vpack.c.bf16 %v1475, %v1474
  %v1487 = vpack.c.bf16 %v1477, %v1476
  %v1488 = vpack.c.bf16 %v1479, %v1478
  %v1489 = vpack.c.bf16 %v1481, %v1480
  %v1490 = vld [vmem:[%s3] sm:$0xf]
  %v1491 = vld [vmem:[%s3 + $0x4] sm:$0xf]
  %v1492 = vld [vmem:[%s3 + $0x8] sm:$0xf]
  %v1493 = vld [vmem:[%s3 + $0xc] sm:$0xf]
  %v1494 = vld [vmem:[%s3 + $0x10] sm:$0xf]
  %v1495 = vld [vmem:[%s3 + $0x14] sm:$0xf]
  %v1496 = vld [vmem:[%s3 + $0x18] sm:$0xf]
  %v1497 = vld [vmem:[%s3 + $0x1c] sm:$0xf]
  %v1498 = vld [vmem:[%s3 + $0x20] sm:$0xf]
  %v1499 = vpack.c.bf16 %v1476, %v1475
  %v1500 = vpack.c.bf16 %v1478, %v1477
  %v1501 = vpack.c.bf16 %v1480, %v1479
  %v1502 = vpack.c.bf16 %v1482, %v1481
  %s1503 = scalar_lea.vmem %s3, 36
  %v1504 = vld [vmem:[%s1503] sm:$0xf]
  %v1505 = vld [vmem:[%s1503 + $0x4] sm:$0xf]
  %v1506 = vld [vmem:[%s1503 + $0x8] sm:$0xf]
  %v1507 = vld [vmem:[%s1503 + $0xc] sm:$0xf]
  %v1508 = vld [vmem:[%s1503 + $0x10] sm:$0xf]
  %v1509 = vld [vmem:[%s1503 + $0x14] sm:$0xf]
  %v1510 = vld [vmem:[%s1503 + $0x18] sm:$0xf]
  %v1511 = vld [vmem:[%s1503 + $0x1c] sm:$0xf]
  %v1512 = vld [vmem:[%s1503 + $0x20] sm:$0xf]
  %v1522 = vunpack.c.l.b16 %v1504
  %v1523 = vunpack.c.l.b16 %v1505
  %v1524 = vunpack.c.l.b16 %v1506
  %v1525 = vunpack.c.l.b16 %v1507
  %v1526 = vunpack.c.l.b16 %v1508
  %v1527 = vunpack.c.l.b16 %v1509
  %v1528 = vunpack.c.l.b16 %v1510
  %v1529 = vunpack.c.l.b16 %v1511
  %v1530 = vunpack.c.l.b16 %v1512
  %v1531 = vpack.c.b16 %v1523, %v1522
  %v1532 = vpack.c.b16 %v1525, %v1524
  %v1533 = vpack.c.b16 %v1527, %v1526
  %v1534 = vpack.c.b16 %v1529, %v1528
  %v1535 = vpack.c.b16 %v1530, %v1530
  %vm1540 = vcmask 588800
  %v1542 = vsel %vm1540, %v1499, 0
  %v1545 = vsel %vm1540, %v1500, 0
  %v1548 = vsel %vm1540, %v1501, 0
  %v1551 = vsel %vm1540, %v1502, 0
  %vm1553 = vcmask 1043456
  %v1555 = vsel %vm1553, %v1535, 0
  %1557 = vmatpush.bf16.msra.mxu0 0
  %1558 = vmatpush.bf16.msra.mxu0 0
  %1559 = vmatpush.bf16.msra.mxu0 0
  %1560 = vmatpush.bf16.msra.mxu0 %v1555
  %1561 = vmatpush.bf16.msra.mxu0 %v1534
  %1562 = vmatpush.bf16.msra.mxu0 %v1533
  %1563 = vmatpush.bf16.msra.mxu0 %v1532
  %1564 = vmatpush.bf16.msra.mxu0 %v1531
  %1565 = vmatmul.bf16.gmra.mxu0 %v1542
  %v1566 = vpop.f32.mrf.mxu0
  %v1567 = vadd.f32 0.0, %v1566
  %v1568 = vpop.f32.mrf.mxu0
  %v1569 = vadd.f32 0.0, %v1568
  %1570 = vmatmul.bf16.gmra.mxu0 %v1545
  %v1571 = vpop.f32.mrf.mxu0
  %v1572 = vadd.f32 0.0, %v1571
  %v1573 = vpop.f32.mrf.mxu0
  %v1574 = vadd.f32 0.0, %v1573
  %1575 = vmatmul.bf16.gmra.mxu0 %v1548
  %v1576 = vpop.f32.mrf.mxu0
  %v1577 = vadd.f32 0.0, %v1576
  %v1578 = vpop.f32.mrf.mxu0
  %v1579 = vadd.f32 0.0, %v1578
  %1580 = vmatmul.bf16.gmra.mxu0 %v1551
  %v1581 = vpop.f32.mrf.mxu0
  %v1582 = vadd.f32 0.0, %v1581
  %v1583 = vpop.f32.mrf.mxu0
  %v1584 = vadd.f32 0.0, %v1583
  %1585 = vdwg.mxu0
  %v1595 = vunpack.c.l.b16 %v1490
  %v1596 = vunpack.c.l.b16 %v1491
  %v1597 = vunpack.c.l.b16 %v1492
  %v1598 = vunpack.c.l.b16 %v1493
  %v1599 = vunpack.c.l.b16 %v1494
  %v1600 = vunpack.c.l.b16 %v1495
  %v1601 = vunpack.c.l.b16 %v1496
  %v1602 = vunpack.c.l.b16 %v1497
  %v1603 = vunpack.c.l.b16 %v1498
  %v1604 = vpack.c.b16 %v1596, %v1595
  %v1605 = vpack.c.b16 %v1598, %v1597
  %v1606 = vpack.c.b16 %v1600, %v1599
  %v1607 = vpack.c.b16 %v1602, %v1601
  %v1608 = vpack.c.b16 %v1603, %v1603
  %v1614 = vsel %vm1540, %v1486, 0
  %v1617 = vsel %vm1540, %v1487, 0
  %v1620 = vsel %vm1540, %v1488, 0
  %v1623 = vsel %vm1540, %v1489, 0
  %v1626 = vsel %vm1553, %v1608, 0
  %1628 = vmatpush.bf16.msra.mxu0 0
  %1629 = vmatpush.bf16.msra.mxu0 0
  %1630 = vmatpush.bf16.msra.mxu0 0
  %1631 = vmatpush.bf16.msra.mxu0 %v1626
  %1632 = vmatpush.bf16.msra.mxu0 %v1607
  %1633 = vmatpush.bf16.msra.mxu0 %v1606
  %1634 = vmatpush.bf16.msra.mxu0 %v1605
  %1635 = vmatpush.bf16.msra.mxu0 %v1604
  %1636 = vmatmul.bf16.gmra.mxu0 %v1614
  %v1637 = vpop.f32.mrf.mxu0
  %v1638 = vadd.f32 %v1567, %v1637
  %v1639 = vpop.f32.mrf.mxu0
  %v1640 = vadd.f32 %v1569, %v1639
  %1641 = vmatmul.bf16.gmra.mxu0 %v1617
  %v1642 = vpop.f32.mrf.mxu0
  %v1643 = vadd.f32 %v1572, %v1642
  %v1644 = vpop.f32.mrf.mxu0
  %v1645 = vadd.f32 %v1574, %v1644
  %1646 = vmatmul.bf16.gmra.mxu0 %v1620
  %v1647 = vpop.f32.mrf.mxu0
  %v1648 = vadd.f32 %v1577, %v1647
  %v1649 = vpop.f32.mrf.mxu0
  %v1650 = vadd.f32 %v1579, %v1649
  %1651 = vmatmul.bf16.gmra.mxu0 %v1623
  %v1652 = vpop.f32.mrf.mxu0
  %v1653 = vadd.f32 %v1582, %v1652
  %v1654 = vpop.f32.mrf.mxu0
  %v1655 = vadd.f32 %v1584, %v1654
  %1656 = vdwg.mxu0
  %v1657 = vpack.c.bf16 %v1483, %v1482
  %s1658 = scalar_lea.vmem %s3, 72
  %v1659 = vld [vmem:[%s1658] sm:$0xf]
  %v1660 = vld [vmem:[%s1658 + $0x4] sm:$0xf]
  %v1661 = vld [vmem:[%s1658 + $0x8] sm:$0xf]
  %v1662 = vld [vmem:[%s1658 + $0xc] sm:$0xf]
  %v1663 = vld [vmem:[%s1658 + $0x10] sm:$0xf]
  %v1664 = vld [vmem:[%s1658 + $0x14] sm:$0xf]
  %v1665 = vld [vmem:[%s1658 + $0x18] sm:$0xf]
  %v1666 = vld [vmem:[%s1658 + $0x1c] sm:$0xf]
  %v1667 = vld [vmem:[%s1658 + $0x20] sm:$0xf]
  %v1677 = vunpack.c.l.b16 %v1659
  %v1678 = vunpack.c.l.b16 %v1660
  %v1679 = vunpack.c.l.b16 %v1661
  %v1680 = vunpack.c.l.b16 %v1662
  %v1681 = vunpack.c.l.b16 %v1663
  %v1682 = vunpack.c.l.b16 %v1664
  %v1683 = vunpack.c.l.b16 %v1665
  %v1684 = vunpack.c.l.b16 %v1666
  %v1685 = vunpack.c.l.b16 %v1667
  %v1686 = vpack.c.b16 %v1678, %v1677
  %v1687 = vpack.c.b16 %v1680, %v1679
  %v1688 = vpack.c.b16 %v1682, %v1681
  %v1689 = vpack.c.b16 %v1684, %v1683
  %v1690 = vpack.c.b16 %v1685, %v1685
  %v1696 = vsel %vm1540, %v1657, 0
  %v1699 = vsel %vm1553, %v1690, 0
  %1701 = vmatpush.bf16.msra.mxu0 0
  %1702 = vmatpush.bf16.msra.mxu0 0
  %1703 = vmatpush.bf16.msra.mxu0 0
  %1704 = vmatpush.bf16.msra.mxu0 %v1699
  %1705 = vmatpush.bf16.msra.mxu0 %v1689
  %1706 = vmatpush.bf16.msra.mxu0 %v1688
  %1707 = vmatpush.bf16.msra.mxu0 %v1687
  %1708 = vmatpush.bf16.msra.mxu0 %v1686
  %1709 = vmatmul.bf16.gmra.mxu0 %v1617
  %v1710 = vpop.f32.mrf.mxu0
  %v1711 = vadd.f32 0.0, %v1710
  %v1712 = vpop.f32.mrf.mxu0
  %v1713 = vadd.f32 0.0, %v1712
  %1714 = vmatmul.bf16.gmra.mxu0 %v1620
  %v1715 = vpop.f32.mrf.mxu0
  %v1716 = vadd.f32 0.0, %v1715
  %v1717 = vpop.f32.mrf.mxu0
  %v1718 = vadd.f32 0.0, %v1717
  %1719 = vmatmul.bf16.gmra.mxu0 %v1623
  %v1720 = vpop.f32.mrf.mxu0
  %v1721 = vadd.f32 0.0, %v1720
  %v1722 = vpop.f32.mrf.mxu0
  %v1723 = vadd.f32 0.0, %v1722
  %1724 = vmatmul.bf16.gmra.mxu0 %v1696
  %v1725 = vpop.f32.mrf.mxu0
  %v1726 = vadd.f32 0.0, %v1725
  %v1727 = vpop.f32.mrf.mxu0
  %v1728 = vadd.f32 0.0, %v1727
  %1729 = vdwg.mxu0
  %v1730 = vadd.f32 %v1638, %v1711
  %v1731 = vadd.f32 %v1640, %v1713
  %v1732 = vadd.f32 %v1643, %v1716
  %v1733 = vadd.f32 %v1645, %v1718
  %v1734 = vadd.f32 %v1648, %v1721
  %v1735 = vadd.f32 %v1650, %v1723
  %v1736 = vadd.f32 %v1653, %v1726
  %v1737 = vadd.f32 %v1655, %v1728
  %v1738 = vpack.c.bf16 %v1484, %v1483
  %s1739 = scalar_lea.vmem %s3, 108
  %v1740 = vld [vmem:[%s1739] sm:$0xf]
  %v1741 = vld [vmem:[%s1739 + $0x4] sm:$0xf]
  %v1742 = vld [vmem:[%s1739 + $0x8] sm:$0xf]
  %v1743 = vld [vmem:[%s1739 + $0xc] sm:$0xf]
  %v1744 = vld [vmem:[%s1739 + $0x10] sm:$0xf]
  %v1745 = vld [vmem:[%s1739 + $0x14] sm:$0xf]
  %v1746 = vld [vmem:[%s1739 + $0x18] sm:$0xf]
  %v1747 = vld [vmem:[%s1739 + $0x1c] sm:$0xf]
  %v1748 = vld [vmem:[%s1739 + $0x20] sm:$0xf]
  %v1758 = vunpack.c.l.b16 %v1740
  %v1759 = vunpack.c.l.b16 %v1741
  %v1760 = vunpack.c.l.b16 %v1742
  %v1761 = vunpack.c.l.b16 %v1743
  %v1762 = vunpack.c.l.b16 %v1744
  %v1763 = vunpack.c.l.b16 %v1745
  %v1764 = vunpack.c.l.b16 %v1746
  %v1765 = vunpack.c.l.b16 %v1747
  %v1766 = vunpack.c.l.b16 %v1748
  %v1767 = vpack.c.b16 %v1759, %v1758
  %v1768 = vpack.c.b16 %v1761, %v1760
  %v1769 = vpack.c.b16 %v1763, %v1762
  %v1770 = vpack.c.b16 %v1765, %v1764
  %v1771 = vpack.c.b16 %v1766, %v1766
  %v1777 = vsel %vm1540, %v1738, 0
  %v1780 = vsel %vm1553, %v1771, 0
  %1782 = vmatpush.bf16.msra.mxu0 0
  %1783 = vmatpush.bf16.msra.mxu0 0
  %1784 = vmatpush.bf16.msra.mxu0 0
  %1785 = vmatpush.bf16.msra.mxu0 %v1780
  %1786 = vmatpush.bf16.msra.mxu0 %v1770
  %1787 = vmatpush.bf16.msra.mxu0 %v1769
  %1788 = vmatpush.bf16.msra.mxu0 %v1768
  %1789 = vmatpush.bf16.msra.mxu0 %v1767
  %1790 = vmatmul.bf16.gmra.mxu0 %v1545
  %v1791 = vpop.f32.mrf.mxu0
  %v1792 = vadd.f32 0.0, %v1791
  %v1793 = vpop.f32.mrf.mxu0
  %v1794 = vadd.f32 0.0, %v1793
  %1795 = vmatmul.bf16.gmra.mxu0 %v1548
  %v1796 = vpop.f32.mrf.mxu0
  %v1797 = vadd.f32 0.0, %v1796
  %v1798 = vpop.f32.mrf.mxu0
  %v1799 = vadd.f32 0.0, %v1798
  %1800 = vmatmul.bf16.gmra.mxu0 %v1551
  %v1801 = vpop.f32.mrf.mxu0
  %v1802 = vadd.f32 0.0, %v1801
  %v1803 = vpop.f32.mrf.mxu0
  %v1804 = vadd.f32 0.0, %v1803
  %1805 = vmatmul.bf16.gmra.mxu0 %v1777
  %v1806 = vpop.f32.mrf.mxu0
  %v1807 = vadd.f32 0.0, %v1806
  %v1808 = vpop.f32.mrf.mxu0
  %v1809 = vadd.f32 0.0, %v1808
  %1810 = vdwg.mxu0
  %v1811 = vadd.f32 %v1730, %v1792
  %v1812 = vadd.f32 %v1731, %v1794
  %v1813 = vadd.f32 %v1732, %v1797
  %v1814 = vadd.f32 %v1733, %v1799
  %v1815 = vadd.f32 %v1734, %v1802
  %v1816 = vadd.f32 %v1735, %v1804
  %v1817 = vadd.f32 %v1736, %v1807
  %v1818 = vadd.f32 %v1737, %v1809
  %v1819 = vpack.c.bf16 %v1485, %v1484
  %s1820 = scalar_lea.vmem %s3, 144
  %v1821 = vld [vmem:[%s1820] sm:$0xf]
  %v1822 = vld [vmem:[%s1820 + $0x4] sm:$0xf]
  %v1823 = vld [vmem:[%s1820 + $0x8] sm:$0xf]
  %v1824 = vld [vmem:[%s1820 + $0xc] sm:$0xf]
  %v1825 = vld [vmem:[%s1820 + $0x10] sm:$0xf]
  %v1826 = vld [vmem:[%s1820 + $0x14] sm:$0xf]
  %v1827 = vld [vmem:[%s1820 + $0x18] sm:$0xf]
  %v1828 = vld [vmem:[%s1820 + $0x1c] sm:$0xf]
  %v1829 = vld [vmem:[%s1820 + $0x20] sm:$0xf]
  %v1839 = vunpack.c.l.b16 %v1821
  %v1840 = vunpack.c.l.b16 %v1822
  %v1841 = vunpack.c.l.b16 %v1823
  %v1842 = vunpack.c.l.b16 %v1824
  %v1843 = vunpack.c.l.b16 %v1825
  %v1844 = vunpack.c.l.b16 %v1826
  %v1845 = vunpack.c.l.b16 %v1827
  %v1846 = vunpack.c.l.b16 %v1828
  %v1847 = vunpack.c.l.b16 %v1829
  %v1848 = vpack.c.b16 %v1840, %v1839
  %v1849 = vpack.c.b16 %v1842, %v1841
  %v1850 = vpack.c.b16 %v1844, %v1843
  %v1851 = vpack.c.b16 %v1846, %v1845
  %v1852 = vpack.c.b16 %v1847, %v1847
  %v1858 = vsel %vm1540, %v1819, 0
  %v1861 = vsel %vm1553, %v1852, 0
  %1863 = vmatpush.bf16.msra.mxu0 0
  %1864 = vmatpush.bf16.msra.mxu0 0
  %1865 = vmatpush.bf16.msra.mxu0 0
  %1866 = vmatpush.bf16.msra.mxu0 %v1861
  %1867 = vmatpush.bf16.msra.mxu0 %v1851
  %1868 = vmatpush.bf16.msra.mxu0 %v1850
  %1869 = vmatpush.bf16.msra.mxu0 %v1849
  %1870 = vmatpush.bf16.msra.mxu0 %v1848
  %1871 = vmatmul.bf16.gmra.mxu0 %v1620
  %v1872 = vpop.f32.mrf.mxu0
  %v1873 = vadd.f32 0.0, %v1872
  %v1874 = vpop.f32.mrf.mxu0
  %v1875 = vadd.f32 0.0, %v1874
  %1876 = vmatmul.bf16.gmra.mxu0 %v1623
  %v1877 = vpop.f32.mrf.mxu0
  %v1878 = vadd.f32 0.0, %v1877
  %v1879 = vpop.f32.mrf.mxu0
  %v1880 = vadd.f32 0.0, %v1879
  %1881 = vmatmul.bf16.gmra.mxu0 %v1696
  %v1882 = vpop.f32.mrf.mxu0
  %v1883 = vadd.f32 0.0, %v1882
  %v1884 = vpop.f32.mrf.mxu0
  %v1885 = vadd.f32 0.0, %v1884
  %1886 = vmatmul.bf16.gmra.mxu0 %v1858
  %v1887 = vpop.f32.mrf.mxu0
  %v1888 = vadd.f32 0.0, %v1887
  %v1889 = vpop.f32.mrf.mxu0
  %v1890 = vadd.f32 0.0, %v1889
  %1891 = vdwg.mxu0
  %v1892 = vadd.f32 %v1811, %v1873
  %v1893 = vadd.f32 %v1812, %v1875
  %v1894 = vadd.f32 %v1813, %v1878
  %v1895 = vadd.f32 %v1814, %v1880
  %v1896 = vadd.f32 %v1815, %v1883
  %v1897 = vadd.f32 %v1816, %v1885
  %v1898 = vadd.f32 %v1817, %v1888
  %v1899 = vadd.f32 %v1818, %v1890
  %v1900 = vld [vmem:[%s4] sm:$0x1]
  %v1902 = vperm.slane %v1900, 0
  %v1904 = vadd.f32 %v1892, %v1902
  %v1905 = vadd.f32 %v1893, %v1902
  %v1906 = vadd.f32 %v1894, %v1902
  %v1907 = vadd.f32 %v1895, %v1902
  %v1908 = vadd.f32 %v1896, %v1902
  %v1909 = vadd.f32 %v1897, %v1902
  %v1910 = vadd.f32 %v1898, %v1902
  %v1911 = vadd.f32 %v1899, %v1902
  %v1912 = vmax.f32 %v1904, 0.0
  %v1913 = vmax.f32 %v1905, 0.0
  %v1914 = vmax.f32 %v1906, 0.0
  %v1915 = vmax.f32 %v1907, 0.0
  %v1916 = vmax.f32 %v1908, 0.0
  %v1917 = vmax.f32 %v1909, 0.0
  %v1918 = vmax.f32 %v1910, 0.0
  %v1919 = vmax.f32 %v1911, 0.0
  %1928 = vrot.lane.b32.xlu0 %v1912, 64
  %v1929 = vpop.permute.xlu0 %1928
  %1930 = vrot.lane.b32.xlu0 %v1913, 64
  %v1931 = vpop.permute.xlu0 %1930
  %1932 = vrot.lane.b32.xlu0 %v1914, 64
  %v1933 = vpop.permute.xlu0 %1932
  %1934 = vrot.lane.b32.xlu0 %v1915, 64
  %v1935 = vpop.permute.xlu0 %1934
  %1936 = vrot.lane.b32.xlu0 %v1916, 64
  %v1937 = vpop.permute.xlu0 %1936
  %1938 = vrot.lane.b32.xlu0 %v1917, 64
  %v1939 = vpop.permute.xlu0 %1938
  %1940 = vrot.lane.b32.xlu0 %v1918, 64
  %v1941 = vpop.permute.xlu0 %1940
  %1942 = vrot.lane.b32.xlu0 %v1919, 64
  %v1943 = vpop.permute.xlu0 %1942
  %v1952 = vmax.f32 %v1912, %v1929
  %v1953 = vmax.f32 %v1913, %v1931
  %v1954 = vmax.f32 %v1914, %v1933
  %v1955 = vmax.f32 %v1915, %v1935
  %v1956 = vmax.f32 %v1916, %v1937
  %v1957 = vmax.f32 %v1917, %v1939
  %v1958 = vmax.f32 %v1918, %v1941
  %v1959 = vmax.f32 %v1919, %v1943
  %v1960 = vmax.f32 %v1952, %v1953
  %v1961 = vmax.f32 %v1954, %v1955
  %v1962 = vmax.f32 %v1956, %v1957
  %v1963 = vmax.f32 %v1958, %v1959
  %1965 = vrot.lane.b32.xlu0 %v1961, 64
  %v1966 = vpop.permute.xlu0 %1965
  %1969 = vrot.lane.b32.xlu0 %v1963, 64
  %v1970 = vpop.permute.xlu0 %1969
  %vm1972 = vcmask 523264
  %v1973 = vsel %vm1972, %v1960, %v1966
  %v1974 = vsel %vm1972, %v1962, %v1970
  %v1975 = vpack.c.bf16 %v1973, %v1973
  %v1976 = vpack.c.bf16 %v1974, %v1974
  %v1977 = vld [vmem:[%s5] sm:$0xf]
  %v1978 = vld [vmem:[%s5 + $0x4] sm:$0xf]
  %v1979 = vld [vmem:[%s5 + $0x8] sm:$0xf]
  %v1980 = vld [vmem:[%s5 + $0xc] sm:$0xf]
  %v1981 = vld [vmem:[%s5 + $0x10] sm:$0xf]
  %v1982 = vld [vmem:[%s5 + $0x14] sm:$0xf]
  %v1983 = vld [vmem:[%s5 + $0x18] sm:$0xf]
  %v1984 = vld [vmem:[%s5 + $0x1c] sm:$0xf]
  %v1985 = vld [vmem:[%s5 + $0x20] sm:$0xf]
  %v1986 = vld [vmem:[%s5 + $0x24] sm:$0xf]
  %v1987 = vld [vmem:[%s5 + $0x28] sm:$0xf]
  %v1988 = vld [vmem:[%s5 + $0x2c] sm:$0xf]
  %v1989 = vld [vmem:[%s5 + $0x30] sm:$0xf]
  %v1990 = vld [vmem:[%s5 + $0x34] sm:$0xf]
  %v1991 = vld [vmem:[%s5 + $0x38] sm:$0xf]
  %v1992 = vld [vmem:[%s5 + $0x3c] sm:$0xf]
  %v1993 = vld [vmem:[%s5 + $0x40] sm:$0xf]
  %v1994 = vld [vmem:[%s5 + $0x44] sm:$0xf]
  %v1995 = vld [vmem:[%s5 + $0x48] sm:$0xf]
  %v1996 = vld [vmem:[%s5 + $0x4c] sm:$0xf]
  %v1997 = vld [vmem:[%s5 + $0x50] sm:$0xf]
  %v1998 = vld [vmem:[%s5 + $0x54] sm:$0xf]
  %v1999 = vld [vmem:[%s5 + $0x58] sm:$0xf]
  %v2000 = vld [vmem:[%s5 + $0x5c] sm:$0xf]
  %v2001 = vld [vmem:[%s5 + $0x60] sm:$0xf]
  %v2002 = vld [vmem:[%s5 + $0x64] sm:$0xf]
  %v2003 = vld [vmem:[%s5 + $0x68] sm:$0xf]
  %v2004 = vld [vmem:[%s5 + $0x6c] sm:$0xf]
  %v2005 = vld [vmem:[%s5 + $0x70] sm:$0xf]
  %v2006 = vld [vmem:[%s5 + $0x74] sm:$0xf]
  %v2007 = vld [vmem:[%s5 + $0x78] sm:$0xf]
  %v2008 = vld [vmem:[%s5 + $0x7c] sm:$0xf]
  %v2009 = vld [vmem:[%s6] sm:$0x1]
  %v2011 = vperm.slane %v2009, 0
  %v2045 = vunpack.c.l.b16 %v1977
  %v2046 = vunpack.c.l.b16 %v1978
  %v2047 = vunpack.c.l.b16 %v1979
  %v2048 = vunpack.c.l.b16 %v1980
  %v2049 = vunpack.c.l.b16 %v1981
  %v2050 = vunpack.c.l.b16 %v1982
  %v2051 = vunpack.c.l.b16 %v1983
  %v2052 = vunpack.c.l.b16 %v1984
  %v2053 = vunpack.c.l.b16 %v1985
  %v2054 = vunpack.c.l.b16 %v1986
  %v2055 = vunpack.c.l.b16 %v1987
  %v2056 = vunpack.c.l.b16 %v1988
  %v2057 = vunpack.c.l.b16 %v1989
  %v2058 = vunpack.c.l.b16 %v1990
  %v2059 = vunpack.c.l.b16 %v1991
  %v2060 = vunpack.c.l.b16 %v1992
  %v2061 = vunpack.c.l.b16 %v1993
  %v2062 = vunpack.c.l.b16 %v1994
  %v2063 = vunpack.c.l.b16 %v1995
  %v2064 = vunpack.c.l.b16 %v1996
  %v2065 = vunpack.c.l.b16 %v1997
  %v2066 = vunpack.c.l.b16 %v1998
  %v2067 = vunpack.c.l.b16 %v1999
  %v2068 = vunpack.c.l.b16 %v2000
  %v2069 = vunpack.c.l.b16 %v2001
  %v2070 = vunpack.c.l.b16 %v2002
  %v2071 = vunpack.c.l.b16 %v2003
  %v2072 = vunpack.c.l.b16 %v2004
  %v2073 = vunpack.c.l.b16 %v2005
  %v2074 = vunpack.c.l.b16 %v2006
  %v2075 = vunpack.c.l.b16 %v2007
  %v2076 = vunpack.c.l.b16 %v2008
  %v2077 = vpack.c.b16 %v2046, %v2045
  %v2078 = vpack.c.b16 %v2048, %v2047
  %v2079 = vpack.c.b16 %v2050, %v2049
  %v2080 = vpack.c.b16 %v2052, %v2051
  %v2081 = vpack.c.b16 %v2054, %v2053
  %v2082 = vpack.c.b16 %v2056, %v2055
  %v2083 = vpack.c.b16 %v2058, %v2057
  %v2084 = vpack.c.b16 %v2060, %v2059
  %v2085 = vpack.c.b16 %v2062, %v2061
  %v2086 = vpack.c.b16 %v2064, %v2063
  %v2087 = vpack.c.b16 %v2066, %v2065
  %v2088 = vpack.c.b16 %v2068, %v2067
  %v2089 = vpack.c.b16 %v2070, %v2069
  %v2090 = vpack.c.b16 %v2072, %v2071
  %v2091 = vpack.c.b16 %v2074, %v2073
  %v2092 = vpack.c.b16 %v2076, %v2075
  %2109 = vmatpush.bf16.msra.mxu0 %v2084
  %2110 = vmatpush.bf16.msra.mxu0 %v2083
  %2111 = vmatpush.bf16.msra.mxu0 %v2082
  %2112 = vmatpush.bf16.msra.mxu0 %v2081
  %2113 = vmatpush.bf16.msra.mxu0 %v2080
  %2114 = vmatpush.bf16.msra.mxu0 %v2079
  %2115 = vmatpush.bf16.msra.mxu0 %v2078
  %2116 = vmatpush.bf16.msra.mxu0 %v2077
  %2117 = vmatmul.bf16.gmra.mxu0 %v1975
  %v2118 = vpop.f32.mrf.mxu0
  %v2119 = vadd.f32 %v2011, %v2118
  %v2120 = vpop.f32.mrf.mxu0
  %2121 = vdwg.mxu0
  %2122 = vmatpush.bf16.msra.mxu0 %v2092
  %2123 = vmatpush.bf16.msra.mxu0 %v2091
  %2124 = vmatpush.bf16.msra.mxu0 %v2090
  %2125 = vmatpush.bf16.msra.mxu0 %v2089
  %2126 = vmatpush.bf16.msra.mxu0 %v2088
  %2127 = vmatpush.bf16.msra.mxu0 %v2087
  %2128 = vmatpush.bf16.msra.mxu0 %v2086
  %2129 = vmatpush.bf16.msra.mxu0 %v2085
  %2130 = vmatmul.bf16.gmra.mxu0 %v1976
  %v2131 = vpop.f32.mrf.mxu0
  %v2132 = vadd.f32 %v2119, %v2131
  %v2133 = vpop.f32.mrf.mxu0
  %2134 = vdwg.mxu0
  %v2135 = vmax.f32 %v2132, 0.0
  %v2136 = vpack.c.bf16 %v2135, %v2135
  %v2137 = vld [vmem:[%s7] sm:$0xf]
  %v2138 = vld [vmem:[%s7 + $0x4] sm:$0xf]
  %v2139 = vld [vmem:[%s7 + $0x8] sm:$0xf]
  %v2140 = vld [vmem:[%s7 + $0xc] sm:$0xf]
  %v2141 = vld [vmem:[%s7 + $0x10] sm:$0xf]
  %v2142 = vld [vmem:[%s7 + $0x14] sm:$0xf]
  %v2143 = vld [vmem:[%s7 + $0x18] sm:$0xf]
  %v2144 = vld [vmem:[%s7 + $0x1c] sm:$0xf]
  %v2145 = vld [vmem:[%s7 + $0x20] sm:$0xf]
  %v2146 = vld [vmem:[%s7 + $0x24] sm:$0xf]
  %v2147 = vld [vmem:[%s7 + $0x28] sm:$0xf]
  %v2148 = vld [vmem:[%s7 + $0x2c] sm:$0xf]
  %v2149 = vld [vmem:[%s7 + $0x30] sm:$0xf]
  %v2150 = vld [vmem:[%s7 + $0x34] sm:$0xf]
  %v2151 = vld [vmem:[%s7 + $0x38] sm:$0xf]
  %v2152 = vld [vmem:[%s8] sm:$0x1]
  %v2154 = vperm.slane %v2152, 0
  %v2171 = vunpack.c.l.b16 %v2137
  %v2172 = vunpack.c.l.b16 %v2138
  %v2173 = vunpack.c.l.b16 %v2139
  %v2174 = vunpack.c.l.b16 %v2140
  %v2175 = vunpack.c.l.b16 %v2141
  %v2176 = vunpack.c.l.b16 %v2142
  %v2177 = vunpack.c.l.b16 %v2143
  %v2178 = vunpack.c.l.b16 %v2144
  %v2179 = vunpack.c.l.b16 %v2145
  %v2180 = vunpack.c.l.b16 %v2146
  %v2181 = vunpack.c.l.b16 %v2147
  %v2182 = vunpack.c.l.b16 %v2148
  %v2183 = vunpack.c.l.b16 %v2149
  %v2184 = vunpack.c.l.b16 %v2150
  %v2185 = vunpack.c.l.b16 %v2151
  %v2186 = vpack.c.b16 %v2172, %v2171
  %v2187 = vpack.c.b16 %v2174, %v2173
  %v2188 = vpack.c.b16 %v2176, %v2175
  %v2189 = vpack.c.b16 %v2178, %v2177
  %v2190 = vpack.c.b16 %v2180, %v2179
  %v2191 = vpack.c.b16 %v2182, %v2181
  %v2192 = vpack.c.b16 %v2184, %v2183
  %v2193 = vpack.c.b16 %v2185, %v2185
  %vm2201 = vcmask 982016
  %v2203 = vsel %vm2201, %v2136, 0
  %v2206 = vsel %vm1553, %v2193, 0
  %2208 = vmatpush.bf16.msra.mxu0 %v2206
  %2209 = vmatpush.bf16.msra.mxu0 %v2192
  %2210 = vmatpush.bf16.msra.mxu0 %v2191
  %2211 = vmatpush.bf16.msra.mxu0 %v2190
  %2212 = vmatpush.bf16.msra.mxu0 %v2189
  %2213 = vmatpush.bf16.msra.mxu0 %v2188
  %2214 = vmatpush.bf16.msra.mxu0 %v2187
  %2215 = vmatpush.bf16.msra.mxu0 %v2186
  %2216 = vmatmul.bf16.gmra.mxu0 %v2203
  %v2217 = vpop.f32.mrf.mxu0
  %v2218 = vadd.f32 %v2154, %v2217
  %v2219 = vpop.f32.mrf.mxu0
  %2220 = vdwg.mxu0
  %v2221 = vmax.f32 %v2218, 0.0
  %v2222 = vpack.c.bf16 %v2221, %v2221
  %v2223 = vld [vmem:[%s9] sm:$0xf]
  %v2224 = vld [vmem:[%s9 + $0x4] sm:$0xf]
  %v2225 = vld [vmem:[%s9 + $0x8] sm:$0xf]
  %v2226 = vld [vmem:[%s9 + $0xc] sm:$0xf]
  %v2227 = vld [vmem:[%s9 + $0x10] sm:$0xf]
  %v2228 = vld [vmem:[%s9 + $0x14] sm:$0xf]
  %v2229 = vld [vmem:[%s9 + $0x18] sm:$0xf]
  %v2230 = vld [vmem:[%s9 + $0x1c] sm:$0xf]
  %v2231 = vld [vmem:[%s9 + $0x20] sm:$0xf]
  %v2232 = vld [vmem:[%s9 + $0x24] sm:$0xf]
  %v2233 = vld [vmem:[%s9 + $0x28] sm:$0x3]
  %v2234 = vld [vmem:[%s10] sm:$0x1]
  %v2236 = vperm.slane %v2234, 0
  %v2249 = vunpack.c.l.b16 %v2223
  %v2250 = vunpack.c.l.b16 %v2224
  %v2251 = vunpack.c.l.b16 %v2225
  %v2252 = vunpack.c.l.b16 %v2226
  %v2253 = vunpack.c.l.b16 %v2227
  %v2254 = vunpack.c.l.b16 %v2228
  %v2255 = vunpack.c.l.b16 %v2229
  %v2256 = vunpack.c.l.b16 %v2230
  %v2257 = vunpack.c.l.b16 %v2231
  %v2258 = vunpack.c.l.b16 %v2232
  %v2259 = vunpack.c.l.b16 %v2233
  %v2260 = vpack.c.b16 %v2250, %v2249
  %v2261 = vpack.c.b16 %v2252, %v2251
  %v2262 = vpack.c.b16 %v2254, %v2253
  %v2263 = vpack.c.b16 %v2256, %v2255
  %v2264 = vpack.c.b16 %v2258, %v2257
  %v2265 = vpack.c.b16 %v2259, %v2259
  %vm2271 = vcmask 687104
  %v2273 = vsel %vm2271, %v2222, 0
  %vm2275 = vcmask 1041408
  %v2277 = vsel %vm2275, %v2265, 0
  %2279 = vmatpush.bf16.msra.mxu0 0
  %2280 = vmatpush.bf16.msra.mxu0 0
  %2281 = vmatpush.bf16.msra.mxu0 %v2277
  %2282 = vmatpush.bf16.msra.mxu0 %v2264
  %2283 = vmatpush.bf16.msra.mxu0 %v2263
  %2284 = vmatpush.bf16.msra.mxu0 %v2262
  %2285 = vmatpush.bf16.msra.mxu0 %v2261
  %2286 = vmatpush.bf16.msra.mxu0 %v2260
  %2287 = vmatmul.bf16.gmra.mxu0 %v2273
  %v2288 = vpop.f32.mrf.mxu0
  %v2289 = vadd.f32 %v2236, %v2288
  %v2290 = vpop.f32.mrf.mxu0
  %2291 = vdwg.mxu0
  %vm2292 = vcmask 80896
  %2293 = vst.msk [vmem:[%s11] sm:$0xff] %vm2292, %v2289
  // Predicated region
  $region46: #{lenet_forward.1} parent=0 // pred_check
    _
  $region47: #{lenet_forward.1} parent=0 // pred_check_branch
    %2295 = sbr.rel (0) target = $region49
  $region48: #{lenet_forward.1} parent=0 // pred_region
    _
  $region49: #{lenet_forward.1} parent=0 // pred_fallthru
    _
  // Predicated region
  $region50: #{lenet_forward.1} parent=0 // pred_check
    _
  $region51: #{lenet_forward.1} parent=0 // pred_check_branch
    %2297 = sbr.rel (0) target = $region53
  $region52: #{lenet_forward.1} parent=0 // pred_region
    _
  $region53: #{lenet_forward.1} parent=0 // pred_fallthru
    _

</llo_original>
